<compile_context>
chip_gen: v6e
topology: v6e:2x2x1
jax: 0.10.0
libtpu: 0.0.40
codegen_flags: <defaults>
</compile_context>

<pallas_src>
import functools

import jax
import jax.numpy as jnp
from jax.experimental import pallas as pl
from jax.experimental.pallas import tpu as pltpu


# --------------------------------------------------------------------------
# Fused Pallas kernel: whole EcoScaleBlock forward for one batch element.
# --------------------------------------------------------------------------
def _eco_block_kernel(x_ref,
                      w11_ref,
                      wst1_ref, bst1_ref,
                      w21_ref,
                      wst2_ref, bst2_ref,
                      w31_ref,
                      wst3_ref, bst3_ref,
                      w4_ref, b4_ref,
                      wres_ref, bres_ref,
                      o_ref,
                      *, L, stage_meta):
    """All weights are pre-folded (BN absorbed).  Shapes:
       x_ref:    (1, L, Cin)
       w11/w21/w31/w4/wres: (Cin_i, Cout_i)      1x1 convs (2D matrices)
       wst*:     (K_u, Cin_i, Cout_i)             packed multi-branch stage conv
       bst*/b4/bres: (1, Cout_i)
    """

    def conv_same(h, w_ref, b_ref, K, left):
        """'same' conv of an in-register activation h: (L, Cin) -> (L, Cout)."""
        cin = h.shape[1]
        right = K - 1 - left
        if left or right:
            parts = []
            if left:
                parts.append(jnp.zeros((left, cin), jnp.float32))
            parts.append(h)
            if right:
                parts.append(jnp.zeros((right, cin), jnp.float32))
            hp = jnp.concatenate(parts, axis=0)           # (L+K-1, Cin)
        else:
            hp = h
        acc = jnp.zeros((L, w_ref.shape[-1]), jnp.float32)
        for j in range(K):                                # K small & static
            acc = acc + jnp.dot(hp[j:j + L, :], w_ref[j],
                                preferred_element_type=jnp.float32)
        return acc + b_ref[...]

    x = x_ref[0].astype(jnp.float32)                      # (L, Cin)

    # residual = BN(Conv1x1(x))   (BN folded into wres/bres)
    r = jnp.dot(x, wres_ref[...],
                preferred_element_type=jnp.float32) + bres_ref[...]

    (k1, l1), (k2, l2), (k3, l3) = stage_meta

    # conv1_1 -> relu
    h = jnp.maximum(jnp.dot(x, w11_ref[...],
                            preferred_element_type=jnp.float32), 0.0)
    # OS_stage1 (+ bn1 folded) -> relu ; dropout1: identity
    h = jnp.maximum(conv_same(h, wst1_ref, bst1_ref, k1, l1), 0.0)

    # conv2_1 -> relu
    h = jnp.maximum(jnp.dot(h, w21_ref[...],
                            preferred_element_type=jnp.float32), 0.0)
    # OS_stage2 (+ bn2 folded) -> relu ; dropout2: identity
    h = jnp.maximum(conv_same(h, wst2_ref, bst2_ref, k2, l2), 0.0)

    # conv3_1 -> relu
    h = jnp.maximum(jnp.dot(h, w31_ref[...],
                            preferred_element_type=jnp.float32), 0.0)
    # OS_stage3 (+ bn3 folded) -> relu
    h = jnp.maximum(conv_same(h, wst3_ref, bst3_ref, k3, l3), 0.0)

    # conv4 (+ bn4 folded) -> add residual -> relu ; dropout3: identity
    h = jnp.dot(h, w4_ref[...],
                preferred_element_type=jnp.float32) + b4_ref[...]
    o_ref[0] = jnp.maximum(h + r, 0.0).astype(o_ref.dtype)


def _rep_spec(a):
    """BlockSpec for a parameter replicated across the batch grid."""
    nd = a.ndim
    return pl.BlockSpec(a.shape, lambda i, nd=nd: (0,) * nd)


def eco_scale_block_forward(x_blc, fused):
    """x_blc: (B, L, Cin) channels-last.  fused: output of prepare_fused_params."""
    B, L, Cin = x_blc.shape
    Cout = fused["wres"].shape[1]

    params = [fused["w11"],
              fused["wst1"], fused["bst1"],
              fused["w21"],
              fused["wst2"], fused["bst2"],
              fused["w31"],
              fused["wst3"], fused["bst3"],
              fused["w4"], fused["b4"],
              fused["wres"], fused["bres"]]

    in_specs = [pl.BlockSpec((1, L, Cin), lambda i: (i, 0, 0))]
    in_specs += [_rep_spec(p) for p in params]

    kern = functools.partial(_eco_block_kernel, L=L,
                             stage_meta=fused["stage_meta"])
    return pl.pallas_call(
        kern,
        out_shape=jax.ShapeDtypeStruct((B, L, Cout), x_blc.dtype),
        grid_spec=pltpu.PrefetchScalarGridSpec(
            num_scalar_prefetch=0,
            grid=(B,),
            in_specs=in_specs,
            out_specs=pl.BlockSpec((1, L, Cout), lambda i: (i, 0, 0)),
        ),
        compiler_params=pltpu.CompilerParams(
            dimension_semantics=("parallel",)),
    )(x_blc, *params)


# --------------------------------------------------------------------------
# Raw parameter init (shapes follow EcoScaleBlock.__init__; eval-mode BN stats)
# --------------------------------------------------------------------------
def init_conv(key, k, cin, cout, bias=True):
    wk, bk = jax.random.split(key)
    bound = 1.0 / jnp.sqrt(float(cin * k))
    w = jax.random.uniform(wk, (k, cin, cout), jnp.float32, -bound, bound)
    b = (jax.random.uniform(bk, (cout,), jnp.float32, -bound, bound)
         if bias else None)
    return w, b


def init_bn(key, c, eps=1e-5):
    k1, k2, k3, k4 = jax.random.split(key, 4)
    gamma = 1.0 + 0.1 * jax.random.normal(k1, (c,), jnp.float32)
    beta = 0.1 * jax.random.normal(k2, (c,), jnp.float32)
    mean = 0.1 * jax.random.normal(k3, (c,), jnp.float32)
    var = 0.5 + 0.5 * jnp.abs(jax.random.normal(k4, (c,), jnp.float32))
    scale = gamma / jnp.sqrt(var + eps)
    shift = beta - mean * scale
    return scale, shift


def init_eco_scale_block(key, kernel_size_list, in_ch, out_ch, last_out_ch):
    nk = len(kernel_size_list)
    keys = iter(jax.random.split(key, 32))
    p = {}
    p["w1_1"], _ = init_conv(next(keys), 1, in_ch, in_ch // 2, bias=False)
    p["stage1"] = [init_conv(next(keys), k, in_ch // 2, out_ch)
                   for k in kernel_size_list]
    p["bn1"] = init_bn(next(keys), out_ch * nk)
    p["w2_1"], _ = init_conv(next(keys), 1, out_ch * nk, out_ch * nk // 2, bias=False)
    p["stage2"] = [init_conv(next(keys), k, out_ch * nk // 2, out_ch)
                   for k in kernel_size_list]
    p["bn2"] = init_bn(next(keys), out_ch * nk)
    p["w3_1"], _ = init_conv(next(keys), 1, out_ch * nk, out_ch * nk // 2, bias=False)
    p["stage3"] = [init_conv(next(keys), k, out_ch * nk // 2, last_out_ch)
                   for k in (1, 2)]
    p["bn3"] = init_bn(next(keys), last_out_ch * 2)
    p["w4"], _ = init_conv(next(keys), 1, last_out_ch * 2, last_out_ch * 2, bias=False)
    p["bn4"] = init_bn(next(keys), last_out_ch * 2)
    p["res_w"], _ = init_conv(next(keys), 1, in_ch, last_out_ch * 2, bias=False)
    p["res_bn"] = init_bn(next(keys), last_out_ch * 2)
    return p


# --------------------------------------------------------------------------
# Parameter folding / packing (pure JAX, runs once outside the kernel)
# --------------------------------------------------------------------------
def _pack_stage(branches, ksizes, cin, cout, bn_scale, bn_shift):
    """Pack OS_stage branch convs into one zero-padded multi-tap weight with
    the branch outputs concatenated on the channel axis, and fold the stage's
    BatchNorm (and conv biases) in.  Returns (W, bias, (K_u, left_u))."""
    lefts = [(k - 1) // 2 for k in ksizes]                 # PyTorch 'same'
    rights = [k - 1 - l for k, l in zip(ksizes, lefts)]
    left_u, right_u = max(lefts), max(rights)
    K_u = left_u + right_u + 1
    nb = len(ksizes)
    W = jnp.zeros((K_u, cin, cout * nb), jnp.float32)
    bias = jnp.zeros((cout * nb,), jnp.float32)
    for bi, ((w, b), k, l) in enumerate(zip(branches, ksizes, lefts)):
        off = left_u - l                                   # align tap windows
        W = W.at[off:off + k, :, bi * cout:(bi + 1) * cout].set(w)
        if b is not None:
            bias = bias.at[bi * cout:(bi + 1) * cout].set(b)
    # fold eval-mode BN:  y = (conv + bias) * scale + shift
    W = W * bn_scale[None, None, :]
    bias = bias * bn_scale + bn_shift
    return W, bias.reshape(1, -1), (K_u, left_u)


def prepare_fused_params(raw, kernel_size_list, in_ch, out_ch, last_out_ch):
    nk = len(kernel_size_list)
    f = {}
    f["w11"] = raw["w1_1"][0]                              # (in_ch, in_ch//2)
    f["wst1"], f["bst1"], m1 = _pack_stage(
        raw["stage1"], kernel_size_list, in_ch // 2, out_ch, *raw["bn1"])
    f["w21"] = raw["w2_1"][0]
    f["wst2"], f["bst2"], m2 = _pack_stage(
        raw["stage2"], kernel_size_list, out_ch * nk // 2, out_ch, *raw["bn2"])
    f["w31"] = raw["w3_1"][0]
    f["wst3"], f["bst3"], m3 = _pack_stage(
        raw["stage3"], [1, 2], out_ch * nk // 2, last_out_ch, *raw["bn3"])
    s4, t4 = raw["bn4"]
    f["w4"] = raw["w4"][0] * s4[None, :]
    f["b4"] = t4.reshape(1, -1)
    sr, tr = raw["res_bn"]
    f["wres"] = raw["res_w"][0] * sr[None, :]
    f["bres"] = tr.reshape(1, -1)
    f["stage_meta"] = (m1, m2, m3)
    return f


# --------------------------------------------------------------------------
# Pure-JAX reference (unfused, unfolded) used for a numerical cross-check
# --------------------------------------------------------------------------
def _ref_conv1d_same(x, w, b=None):
    B, L, Cin = x.shape
    K, _, Cout = w.shape
    left = (K - 1) // 2
    right = K - 1 - left
    xp = jnp.pad(x, ((0, 0), (left, right), (0, 0)))
    out = jnp.zeros((B, L, Cout), jnp.float32)
    for j in range(K):
        out = out + jnp.einsum("blc,cd->bld", xp[:, j:j + L, :], w[j])
    if b is not None:
        out = out + b
    return out


def _ref_forward(x, raw):
    def bn(v, sc, sh):
        return v * sc + sh
    r = bn(_ref_conv1d_same(x, raw["res_w"]), *raw["res_bn"])
    h = jax.nn.relu(_ref_conv1d_same(x, raw["w1_1"]))
    h = jnp.concatenate([_ref_conv1d_same(h, w, b) for w, b in raw["stage1"]], -1)
    h = jax.nn.relu(bn(h, *raw["bn1"]))
    h = jax.nn.relu(_ref_conv1d_same(h, raw["w2_1"]))
    h = jnp.concatenate([_ref_conv1d_same(h, w, b) for w, b in raw["stage2"]], -1)
    h = jax.nn.relu(bn(h, *raw["bn2"]))
    h = jax.nn.relu(_ref_conv1d_same(h, raw["w3_1"]))
    h = jnp.concatenate([_ref_conv1d_same(h, w, b) for w, b in raw["stage3"]], -1)
    h = jax.nn.relu(bn(h, *raw["bn3"]))
    h = bn(_ref_conv1d_same(h, raw["w4"]), *raw["bn4"])
    return jax.nn.relu(h + r)


# --------------------------------------------------------------------------
if __name__ == "__main__":
    B, in_ch, L = 2, 8, 16
    kernel_size_list = [3, 5, 7]
    out_ch, last_out_ch = 4, 4

    key = jax.random.PRNGKey(0)
    kx, kp = jax.random.split(key)

    # input in PyTorch convention (B, C, L), then to channels-last (B, L, C)
    x_ncl = jax.random.normal(kx, (B, in_ch, L), jnp.float32)
    x_blc = jnp.transpose(x_ncl, (0, 2, 1))

    raw = init_eco_scale_block(kp, kernel_size_list, in_ch, out_ch, last_out_ch)
    fused = prepare_fused_params(raw, kernel_size_list, in_ch, out_ch, last_out_ch)

    y_blc = eco_scale_block_forward(x_blc, fused)
    jax.block_until_ready(y_blc)
    y_ncl = jnp.transpose(y_blc, (0, 2, 1))       # back to (B, last_out_ch*2, L)

    assert y_ncl.shape == (B, last_out_ch * 2, L), y_ncl.shape
    assert bool(jnp.all(jnp.isfinite(y_ncl)))

    # cross-check the fused/folded kernel against an unfused pure-JAX reference
    y_ref = _ref_forward(x_blc, raw)
    max_err = float(jnp.max(jnp.abs(y_blc - y_ref)))
    assert max_err < 2e-3, max_err

    print("KERNEL_OK")
</pallas_src>

<mosaic_0001>
module attributes {stable_mosaic.version = 11 : i64} {
  func.func @_eco_block_kernel(%arg0: i32, %arg1: memref<1x16x8xf32, #tpu.memory_space<vmem>>, %arg2: memref<8x4xf32, #tpu.memory_space<vmem>>, %arg3: memref<7x4x12xf32, #tpu.memory_space<vmem>>, %arg4: memref<1x12xf32, #tpu.memory_space<vmem>>, %arg5: memref<12x6xf32, #tpu.memory_space<vmem>>, %arg6: memref<7x6x12xf32, #tpu.memory_space<vmem>>, %arg7: memref<1x12xf32, #tpu.memory_space<vmem>>, %arg8: memref<12x6xf32, #tpu.memory_space<vmem>>, %arg9: memref<2x6x8xf32, #tpu.memory_space<vmem>>, %arg10: memref<1x8xf32, #tpu.memory_space<vmem>>, %arg11: memref<8x8xf32, #tpu.memory_space<vmem>>, %arg12: memref<1x8xf32, #tpu.memory_space<vmem>>, %arg13: memref<8x8xf32, #tpu.memory_space<vmem>>, %arg14: memref<1x8xf32, #tpu.memory_space<vmem>>, %arg15: memref<1x16x8xf32, #tpu.memory_space<vmem>>) attributes {dimension_semantics = [#tpu.dimension_semantics<parallel>], iteration_bounds = array<i64: 2>, scalar_prefetch = 0 : i64, scratch_operands = 0 : i64, tpu.core_type = #tpu.core_type<tc>, window_params = [{transform_indices = @transform_0, window_bounds = array<i64: 1, 16, 8>}, {pipeline_mode = #tpu.pipeline_mode<synchronous>, transform_indices = @transform_1, window_bounds = array<i64: 8, 4>}, {pipeline_mode = #tpu.pipeline_mode<synchronous>, transform_indices = @transform_2, window_bounds = array<i64: 7, 4, 12>}, {pipeline_mode = #tpu.pipeline_mode<synchronous>, transform_indices = @transform_3, window_bounds = array<i64: 1, 12>}, {pipeline_mode = #tpu.pipeline_mode<synchronous>, transform_indices = @transform_4, window_bounds = array<i64: 12, 6>}, {pipeline_mode = #tpu.pipeline_mode<synchronous>, transform_indices = @transform_5, window_bounds = array<i64: 7, 6, 12>}, {pipeline_mode = #tpu.pipeline_mode<synchronous>, transform_indices = @transform_6, window_bounds = array<i64: 1, 12>}, {pipeline_mode = #tpu.pipeline_mode<synchronous>, transform_indices = @transform_7, window_bounds = array<i64: 12, 6>}, {pipeline_mode = #tpu.pipeline_mode<synchronous>, transform_indices = @transform_8, window_bounds = array<i64: 2, 6, 8>}, {pipeline_mode = #tpu.pipeline_mode<synchronous>, transform_indices = @transform_9, window_bounds = array<i64: 1, 8>}, {pipeline_mode = #tpu.pipeline_mode<synchronous>, transform_indices = @transform_10, window_bounds = array<i64: 8, 8>}, {pipeline_mode = #tpu.pipeline_mode<synchronous>, transform_indices = @transform_11, window_bounds = array<i64: 1, 8>}, {pipeline_mode = #tpu.pipeline_mode<synchronous>, transform_indices = @transform_12, window_bounds = array<i64: 8, 8>}, {pipeline_mode = #tpu.pipeline_mode<synchronous>, transform_indices = @transform_13, window_bounds = array<i64: 1, 8>}, {transform_indices = @transform_14, window_bounds = array<i64: 1, 16, 8>}]} {
    %c0 = arith.constant 0 : index
    %c0_0 = arith.constant 0 : index
    %c0_1 = arith.constant 0 : index
    %0 = vector.load %arg1[%c0, %c0_0, %c0_1] : memref<1x16x8xf32, #tpu.memory_space<vmem>>, vector<1x16x8xf32>
    %1 = vector.shape_cast %0 : vector<1x16x8xf32> to vector<16x8xf32>
    %c0_2 = arith.constant 0 : index
    %c0_3 = arith.constant 0 : index
    %2 = vector.load %arg13[%c0_2, %c0_3] : memref<8x8xf32, #tpu.memory_space<vmem>>, vector<8x8xf32>
    %cst = arith.constant dense<0.000000e+00> : vector<16x8xf32>
    %3 = tpu.matmul %1, %2, %cst {dimension_numbers = #tpu.dot_dimension_numbers<[1], [0], [0], [1], [0, 0, 1, 1], [], []>} : vector<16x8xf32>, vector<8x8xf32>, vector<16x8xf32> -> vector<16x8xf32>
    %c0_4 = arith.constant 0 : index
    %c0_5 = arith.constant 0 : index
    %4 = vector.load %arg14[%c0_4, %c0_5] : memref<1x8xf32, #tpu.memory_space<vmem>>, vector<1x8xf32>
    %5 = vector.broadcast %4 : vector<1x8xf32> to vector<16x8xf32>
    %6 = arith.addf %3, %5 : vector<16x8xf32>
    %c0_6 = arith.constant 0 : index
    %c0_7 = arith.constant 0 : index
    %7 = vector.load %arg2[%c0_6, %c0_7] : memref<8x4xf32, #tpu.memory_space<vmem>>, vector<8x4xf32>
    %cst_8 = arith.constant dense<0.000000e+00> : vector<16x4xf32>
    %8 = tpu.matmul %1, %7, %cst_8 {dimension_numbers = #tpu.dot_dimension_numbers<[1], [0], [0], [1], [0, 0, 1, 1], [], []>} : vector<16x8xf32>, vector<8x4xf32>, vector<16x4xf32> -> vector<16x4xf32>
    %cst_9 = arith.constant 0.000000e+00 : f32
    %9 = vector.broadcast %cst_9 : f32 to vector<16x4xf32>
    %10 = arith.maximumf %8, %9 : vector<16x4xf32>
    %cst_10 = arith.constant 0.000000e+00 : f32
    %11 = vector.broadcast %cst_10 : f32 to vector<3x4xf32>
    %cst_11 = arith.constant 0.000000e+00 : f32
    %12 = vector.broadcast %cst_11 : f32 to vector<3x4xf32>
    %13 = tpu.concatenate %11, %10, %12 in 0 : vector<3x4xf32>, vector<16x4xf32>, vector<3x4xf32> -> vector<22x4xf32>
    %cst_12 = arith.constant 0.000000e+00 : f32
    %14 = vector.broadcast %cst_12 : f32 to vector<16x12xf32>
    %15 = vector.extract_strided_slice %13 {offsets = [0, 0], sizes = [16, 4], strides = [1, 1]} : vector<22x4xf32> to vector<16x4xf32>
    %c0_13 = arith.constant 0 : index
    %c0_14 = arith.constant 0 : index
    %c0_15 = arith.constant 0 : index
    %16 = vector.load %arg3[%c0_13, %c0_14, %c0_15] : memref<7x4x12xf32, #tpu.memory_space<vmem>>, vector<1x4x12xf32>
    %17 = vector.shape_cast %16 : vector<1x4x12xf32> to vector<4x12xf32>
    %cst_16 = arith.constant dense<0.000000e+00> : vector<16x12xf32>
    %18 = tpu.matmul %15, %17, %cst_16 {dimension_numbers = #tpu.dot_dimension_numbers<[1], [0], [0], [1], [0, 0, 1, 1], [], []>} : vector<16x4xf32>, vector<4x12xf32>, vector<16x12xf32> -> vector<16x12xf32>
    %19 = arith.addf %14, %18 : vector<16x12xf32>
    %20 = vector.extract_strided_slice %13 {offsets = [1, 0], sizes = [16, 4], strides = [1, 1]} : vector<22x4xf32> to vector<16x4xf32>
    %c1 = arith.constant 1 : index
    %c0_17 = arith.constant 0 : index
    %c0_18 = arith.constant 0 : index
    %21 = vector.load %arg3[%c1, %c0_17, %c0_18] : memref<7x4x12xf32, #tpu.memory_space<vmem>>, vector<1x4x12xf32>
    %22 = vector.shape_cast %21 : vector<1x4x12xf32> to vector<4x12xf32>
    %cst_19 = arith.constant dense<0.000000e+00> : vector<16x12xf32>
    %23 = tpu.matmul %20, %22, %cst_19 {dimension_numbers = #tpu.dot_dimension_numbers<[1], [0], [0], [1], [0, 0, 1, 1], [], []>} : vector<16x4xf32>, vector<4x12xf32>, vector<16x12xf32> -> vector<16x12xf32>
    %24 = arith.addf %19, %23 : vector<16x12xf32>
    %25 = vector.extract_strided_slice %13 {offsets = [2, 0], sizes = [16, 4], strides = [1, 1]} : vector<22x4xf32> to vector<16x4xf32>
    %c2 = arith.constant 2 : index
    %c0_20 = arith.constant 0 : index
    %c0_21 = arith.constant 0 : index
    %26 = vector.load %arg3[%c2, %c0_20, %c0_21] : memref<7x4x12xf32, #tpu.memory_space<vmem>>, vector<1x4x12xf32>
    %27 = vector.shape_cast %26 : vector<1x4x12xf32> to vector<4x12xf32>
    %cst_22 = arith.constant dense<0.000000e+00> : vector<16x12xf32>
    %28 = tpu.matmul %25, %27, %cst_22 {dimension_numbers = #tpu.dot_dimension_numbers<[1], [0], [0], [1], [0, 0, 1, 1], [], []>} : vector<16x4xf32>, vector<4x12xf32>, vector<16x12xf32> -> vector<16x12xf32>
    %29 = arith.addf %24, %28 : vector<16x12xf32>
    %30 = vector.extract_strided_slice %13 {offsets = [3, 0], sizes = [16, 4], strides = [1, 1]} : vector<22x4xf32> to vector<16x4xf32>
    %c3 = arith.constant 3 : index
    %c0_23 = arith.constant 0 : index
    %c0_24 = arith.constant 0 : index
    %31 = vector.load %arg3[%c3, %c0_23, %c0_24] : memref<7x4x12xf32, #tpu.memory_space<vmem>>, vector<1x4x12xf32>
    %32 = vector.shape_cast %31 : vector<1x4x12xf32> to vector<4x12xf32>
    %cst_25 = arith.constant dense<0.000000e+00> : vector<16x12xf32>
    %33 = tpu.matmul %30, %32, %cst_25 {dimension_numbers = #tpu.dot_dimension_numbers<[1], [0], [0], [1], [0, 0, 1, 1], [], []>} : vector<16x4xf32>, vector<4x12xf32>, vector<16x12xf32> -> vector<16x12xf32>
    %34 = arith.addf %29, %33 : vector<16x12xf32>
    %35 = vector.extract_strided_slice %13 {offsets = [4, 0], sizes = [16, 4], strides = [1, 1]} : vector<22x4xf32> to vector<16x4xf32>
    %c4 = arith.constant 4 : index
    %c0_26 = arith.constant 0 : index
    %c0_27 = arith.constant 0 : index
    %36 = vector.load %arg3[%c4, %c0_26, %c0_27] : memref<7x4x12xf32, #tpu.memory_space<vmem>>, vector<1x4x12xf32>
    %37 = vector.shape_cast %36 : vector<1x4x12xf32> to vector<4x12xf32>
    %cst_28 = arith.constant dense<0.000000e+00> : vector<16x12xf32>
    %38 = tpu.matmul %35, %37, %cst_28 {dimension_numbers = #tpu.dot_dimension_numbers<[1], [0], [0], [1], [0, 0, 1, 1], [], []>} : vector<16x4xf32>, vector<4x12xf32>, vector<16x12xf32> -> vector<16x12xf32>
    %39 = arith.addf %34, %38 : vector<16x12xf32>
    %40 = vector.extract_strided_slice %13 {offsets = [5, 0], sizes = [16, 4], strides = [1, 1]} : vector<22x4xf32> to vector<16x4xf32>
    %c5 = arith.constant 5 : index
    %c0_29 = arith.constant 0 : index
    %c0_30 = arith.constant 0 : index
    %41 = vector.load %arg3[%c5, %c0_29, %c0_30] : memref<7x4x12xf32, #tpu.memory_space<vmem>>, vector<1x4x12xf32>
    %42 = vector.shape_cast %41 : vector<1x4x12xf32> to vector<4x12xf32>
    %cst_31 = arith.constant dense<0.000000e+00> : vector<16x12xf32>
    %43 = tpu.matmul %40, %42, %cst_31 {dimension_numbers = #tpu.dot_dimension_numbers<[1], [0], [0], [1], [0, 0, 1, 1], [], []>} : vector<16x4xf32>, vector<4x12xf32>, vector<16x12xf32> -> vector<16x12xf32>
    %44 = arith.addf %39, %43 : vector<16x12xf32>
    %45 = vector.extract_strided_slice %13 {offsets = [6, 0], sizes = [16, 4], strides = [1, 1]} : vector<22x4xf32> to vector<16x4xf32>
    %c6 = arith.constant 6 : index
    %c0_32 = arith.constant 0 : index
    %c0_33 = arith.constant 0 : index
    %46 = vector.load %arg3[%c6, %c0_32, %c0_33] : memref<7x4x12xf32, #tpu.memory_space<vmem>>, vector<1x4x12xf32>
    %47 = vector.shape_cast %46 : vector<1x4x12xf32> to vector<4x12xf32>
    %cst_34 = arith.constant dense<0.000000e+00> : vector<16x12xf32>
    %48 = tpu.matmul %45, %47, %cst_34 {dimension_numbers = #tpu.dot_dimension_numbers<[1], [0], [0], [1], [0, 0, 1, 1], [], []>} : vector<16x4xf32>, vector<4x12xf32>, vector<16x12xf32> -> vector<16x12xf32>
    %49 = arith.addf %44, %48 : vector<16x12xf32>
    %c0_35 = arith.constant 0 : index
    %c0_36 = arith.constant 0 : index
    %50 = vector.load %arg4[%c0_35, %c0_36] : memref<1x12xf32, #tpu.memory_space<vmem>>, vector<1x12xf32>
    %51 = vector.broadcast %50 : vector<1x12xf32> to vector<16x12xf32>
    %52 = arith.addf %49, %51 : vector<16x12xf32>
    %cst_37 = arith.constant 0.000000e+00 : f32
    %53 = vector.broadcast %cst_37 : f32 to vector<16x12xf32>
    %54 = arith.maximumf %52, %53 : vector<16x12xf32>
    %c0_38 = arith.constant 0 : index
    %c0_39 = arith.constant 0 : index
    %55 = vector.load %arg5[%c0_38, %c0_39] : memref<12x6xf32, #tpu.memory_space<vmem>>, vector<12x6xf32>
    %cst_40 = arith.constant dense<0.000000e+00> : vector<16x6xf32>
    %56 = tpu.matmul %54, %55, %cst_40 {dimension_numbers = #tpu.dot_dimension_numbers<[1], [0], [0], [1], [0, 0, 1, 1], [], []>} : vector<16x12xf32>, vector<12x6xf32>, vector<16x6xf32> -> vector<16x6xf32>
    %cst_41 = arith.constant 0.000000e+00 : f32
    %57 = vector.broadcast %cst_41 : f32 to vector<16x6xf32>
    %58 = arith.maximumf %56, %57 : vector<16x6xf32>
    %cst_42 = arith.constant 0.000000e+00 : f32
    %59 = vector.broadcast %cst_42 : f32 to vector<3x6xf32>
    %cst_43 = arith.constant 0.000000e+00 : f32
    %60 = vector.broadcast %cst_43 : f32 to vector<3x6xf32>
    %61 = tpu.concatenate %59, %58, %60 in 0 : vector<3x6xf32>, vector<16x6xf32>, vector<3x6xf32> -> vector<22x6xf32>
    %cst_44 = arith.constant 0.000000e+00 : f32
    %62 = vector.broadcast %cst_44 : f32 to vector<16x12xf32>
    %63 = vector.extract_strided_slice %61 {offsets = [0, 0], sizes = [16, 6], strides = [1, 1]} : vector<22x6xf32> to vector<16x6xf32>
    %c0_45 = arith.constant 0 : index
    %c0_46 = arith.constant 0 : index
    %c0_47 = arith.constant 0 : index
    %64 = vector.load %arg6[%c0_45, %c0_46, %c0_47] : memref<7x6x12xf32, #tpu.memory_space<vmem>>, vector<1x6x12xf32>
    %65 = vector.shape_cast %64 : vector<1x6x12xf32> to vector<6x12xf32>
    %cst_48 = arith.constant dense<0.000000e+00> : vector<16x12xf32>
    %66 = tpu.matmul %63, %65, %cst_48 {dimension_numbers = #tpu.dot_dimension_numbers<[1], [0], [0], [1], [0, 0, 1, 1], [], []>} : vector<16x6xf32>, vector<6x12xf32>, vector<16x12xf32> -> vector<16x12xf32>
    %67 = arith.addf %62, %66 : vector<16x12xf32>
    %68 = vector.extract_strided_slice %61 {offsets = [1, 0], sizes = [16, 6], strides = [1, 1]} : vector<22x6xf32> to vector<16x6xf32>
    %c1_49 = arith.constant 1 : index
    %c0_50 = arith.constant 0 : index
    %c0_51 = arith.constant 0 : index
    %69 = vector.load %arg6[%c1_49, %c0_50, %c0_51] : memref<7x6x12xf32, #tpu.memory_space<vmem>>, vector<1x6x12xf32>
    %70 = vector.shape_cast %69 : vector<1x6x12xf32> to vector<6x12xf32>
    %cst_52 = arith.constant dense<0.000000e+00> : vector<16x12xf32>
    %71 = tpu.matmul %68, %70, %cst_52 {dimension_numbers = #tpu.dot_dimension_numbers<[1], [0], [0], [1], [0, 0, 1, 1], [], []>} : vector<16x6xf32>, vector<6x12xf32>, vector<16x12xf32> -> vector<16x12xf32>
    %72 = arith.addf %67, %71 : vector<16x12xf32>
    %73 = vector.extract_strided_slice %61 {offsets = [2, 0], sizes = [16, 6], strides = [1, 1]} : vector<22x6xf32> to vector<16x6xf32>
    %c2_53 = arith.constant 2 : index
    %c0_54 = arith.constant 0 : index
    %c0_55 = arith.constant 0 : index
    %74 = vector.load %arg6[%c2_53, %c0_54, %c0_55] : memref<7x6x12xf32, #tpu.memory_space<vmem>>, vector<1x6x12xf32>
    %75 = vector.shape_cast %74 : vector<1x6x12xf32> to vector<6x12xf32>
    %cst_56 = arith.constant dense<0.000000e+00> : vector<16x12xf32>
    %76 = tpu.matmul %73, %75, %cst_56 {dimension_numbers = #tpu.dot_dimension_numbers<[1], [0], [0], [1], [0, 0, 1, 1], [], []>} : vector<16x6xf32>, vector<6x12xf32>, vector<16x12xf32> -> vector<16x12xf32>
    %77 = arith.addf %72, %76 : vector<16x12xf32>
    %78 = vector.extract_strided_slice %61 {offsets = [3, 0], sizes = [16, 6], strides = [1, 1]} : vector<22x6xf32> to vector<16x6xf32>
    %c3_57 = arith.constant 3 : index
    %c0_58 = arith.constant 0 : index
    %c0_59 = arith.constant 0 : index
    %79 = vector.load %arg6[%c3_57, %c0_58, %c0_59] : memref<7x6x12xf32, #tpu.memory_space<vmem>>, vector<1x6x12xf32>
    %80 = vector.shape_cast %79 : vector<1x6x12xf32> to vector<6x12xf32>
    %cst_60 = arith.constant dense<0.000000e+00> : vector<16x12xf32>
    %81 = tpu.matmul %78, %80, %cst_60 {dimension_numbers = #tpu.dot_dimension_numbers<[1], [0], [0], [1], [0, 0, 1, 1], [], []>} : vector<16x6xf32>, vector<6x12xf32>, vector<16x12xf32> -> vector<16x12xf32>
    %82 = arith.addf %77, %81 : vector<16x12xf32>
    %83 = vector.extract_strided_slice %61 {offsets = [4, 0], sizes = [16, 6], strides = [1, 1]} : vector<22x6xf32> to vector<16x6xf32>
    %c4_61 = arith.constant 4 : index
    %c0_62 = arith.constant 0 : index
    %c0_63 = arith.constant 0 : index
    %84 = vector.load %arg6[%c4_61, %c0_62, %c0_63] : memref<7x6x12xf32, #tpu.memory_space<vmem>>, vector<1x6x12xf32>
    %85 = vector.shape_cast %84 : vector<1x6x12xf32> to vector<6x12xf32>
    %cst_64 = arith.constant dense<0.000000e+00> : vector<16x12xf32>
    %86 = tpu.matmul %83, %85, %cst_64 {dimension_numbers = #tpu.dot_dimension_numbers<[1], [0], [0], [1], [0, 0, 1, 1], [], []>} : vector<16x6xf32>, vector<6x12xf32>, vector<16x12xf32> -> vector<16x12xf32>
    %87 = arith.addf %82, %86 : vector<16x12xf32>
    %88 = vector.extract_strided_slice %61 {offsets = [5, 0], sizes = [16, 6], strides = [1, 1]} : vector<22x6xf32> to vector<16x6xf32>
    %c5_65 = arith.constant 5 : index
    %c0_66 = arith.constant 0 : index
    %c0_67 = arith.constant 0 : index
    %89 = vector.load %arg6[%c5_65, %c0_66, %c0_67] : memref<7x6x12xf32, #tpu.memory_space<vmem>>, vector<1x6x12xf32>
    %90 = vector.shape_cast %89 : vector<1x6x12xf32> to vector<6x12xf32>
    %cst_68 = arith.constant dense<0.000000e+00> : vector<16x12xf32>
    %91 = tpu.matmul %88, %90, %cst_68 {dimension_numbers = #tpu.dot_dimension_numbers<[1], [0], [0], [1], [0, 0, 1, 1], [], []>} : vector<16x6xf32>, vector<6x12xf32>, vector<16x12xf32> -> vector<16x12xf32>
    %92 = arith.addf %87, %91 : vector<16x12xf32>
    %93 = vector.extract_strided_slice %61 {offsets = [6, 0], sizes = [16, 6], strides = [1, 1]} : vector<22x6xf32> to vector<16x6xf32>
    %c6_69 = arith.constant 6 : index
    %c0_70 = arith.constant 0 : index
    %c0_71 = arith.constant 0 : index
    %94 = vector.load %arg6[%c6_69, %c0_70, %c0_71] : memref<7x6x12xf32, #tpu.memory_space<vmem>>, vector<1x6x12xf32>
    %95 = vector.shape_cast %94 : vector<1x6x12xf32> to vector<6x12xf32>
    %cst_72 = arith.constant dense<0.000000e+00> : vector<16x12xf32>
    %96 = tpu.matmul %93, %95, %cst_72 {dimension_numbers = #tpu.dot_dimension_numbers<[1], [0], [0], [1], [0, 0, 1, 1], [], []>} : vector<16x6xf32>, vector<6x12xf32>, vector<16x12xf32> -> vector<16x12xf32>
    %97 = arith.addf %92, %96 : vector<16x12xf32>
    %c0_73 = arith.constant 0 : index
    %c0_74 = arith.constant 0 : index
    %98 = vector.load %arg7[%c0_73, %c0_74] : memref<1x12xf32, #tpu.memory_space<vmem>>, vector<1x12xf32>
    %99 = vector.broadcast %98 : vector<1x12xf32> to vector<16x12xf32>
    %100 = arith.addf %97, %99 : vector<16x12xf32>
    %cst_75 = arith.constant 0.000000e+00 : f32
    %101 = vector.broadcast %cst_75 : f32 to vector<16x12xf32>
    %102 = arith.maximumf %100, %101 : vector<16x12xf32>
    %c0_76 = arith.constant 0 : index
    %c0_77 = arith.constant 0 : index
    %103 = vector.load %arg8[%c0_76, %c0_77] : memref<12x6xf32, #tpu.memory_space<vmem>>, vector<12x6xf32>
    %cst_78 = arith.constant dense<0.000000e+00> : vector<16x6xf32>
    %104 = tpu.matmul %102, %103, %cst_78 {dimension_numbers = #tpu.dot_dimension_numbers<[1], [0], [0], [1], [0, 0, 1, 1], [], []>} : vector<16x12xf32>, vector<12x6xf32>, vector<16x6xf32> -> vector<16x6xf32>
    %cst_79 = arith.constant 0.000000e+00 : f32
    %105 = vector.broadcast %cst_79 : f32 to vector<16x6xf32>
    %106 = arith.maximumf %104, %105 : vector<16x6xf32>
    %cst_80 = arith.constant 0.000000e+00 : f32
    %107 = vector.broadcast %cst_80 : f32 to vector<1x6xf32>
    %108 = tpu.concatenate %106, %107 in 0 : vector<16x6xf32>, vector<1x6xf32> -> vector<17x6xf32>
    %cst_81 = arith.constant 0.000000e+00 : f32
    %109 = vector.broadcast %cst_81 : f32 to vector<16x8xf32>
    %110 = vector.extract_strided_slice %108 {offsets = [0, 0], sizes = [16, 6], strides = [1, 1]} : vector<17x6xf32> to vector<16x6xf32>
    %c0_82 = arith.constant 0 : index
    %c0_83 = arith.constant 0 : index
    %c0_84 = arith.constant 0 : index
    %111 = vector.load %arg9[%c0_82, %c0_83, %c0_84] : memref<2x6x8xf32, #tpu.memory_space<vmem>>, vector<1x6x8xf32>
    %112 = vector.shape_cast %111 : vector<1x6x8xf32> to vector<6x8xf32>
    %cst_85 = arith.constant dense<0.000000e+00> : vector<16x8xf32>
    %113 = tpu.matmul %110, %112, %cst_85 {dimension_numbers = #tpu.dot_dimension_numbers<[1], [0], [0], [1], [0, 0, 1, 1], [], []>} : vector<16x6xf32>, vector<6x8xf32>, vector<16x8xf32> -> vector<16x8xf32>
    %114 = arith.addf %109, %113 : vector<16x8xf32>
    %115 = vector.extract_strided_slice %108 {offsets = [1, 0], sizes = [16, 6], strides = [1, 1]} : vector<17x6xf32> to vector<16x6xf32>
    %c1_86 = arith.constant 1 : index
    %c0_87 = arith.constant 0 : index
    %c0_88 = arith.constant 0 : index
    %116 = vector.load %arg9[%c1_86, %c0_87, %c0_88] : memref<2x6x8xf32, #tpu.memory_space<vmem>>, vector<1x6x8xf32>
    %117 = vector.shape_cast %116 : vector<1x6x8xf32> to vector<6x8xf32>
    %cst_89 = arith.constant dense<0.000000e+00> : vector<16x8xf32>
    %118 = tpu.matmul %115, %117, %cst_89 {dimension_numbers = #tpu.dot_dimension_numbers<[1], [0], [0], [1], [0, 0, 1, 1], [], []>} : vector<16x6xf32>, vector<6x8xf32>, vector<16x8xf32> -> vector<16x8xf32>
    %119 = arith.addf %114, %118 : vector<16x8xf32>
    %c0_90 = arith.constant 0 : index
    %c0_91 = arith.constant 0 : index
    %120 = vector.load %arg10[%c0_90, %c0_91] : memref<1x8xf32, #tpu.memory_space<vmem>>, vector<1x8xf32>
    %121 = vector.broadcast %120 : vector<1x8xf32> to vector<16x8xf32>
    %122 = arith.addf %119, %121 : vector<16x8xf32>
    %cst_92 = arith.constant 0.000000e+00 : f32
    %123 = vector.broadcast %cst_92 : f32 to vector<16x8xf32>
    %124 = arith.maximumf %122, %123 : vector<16x8xf32>
    %c0_93 = arith.constant 0 : index
    %c0_94 = arith.constant 0 : index
    %125 = vector.load %arg11[%c0_93, %c0_94] : memref<8x8xf32, #tpu.memory_space<vmem>>, vector<8x8xf32>
    %cst_95 = arith.constant dense<0.000000e+00> : vector<16x8xf32>
    %126 = tpu.matmul %124, %125, %cst_95 {dimension_numbers = #tpu.dot_dimension_numbers<[1], [0], [0], [1], [0, 0, 1, 1], [], []>} : vector<16x8xf32>, vector<8x8xf32>, vector<16x8xf32> -> vector<16x8xf32>
    %c0_96 = arith.constant 0 : index
    %c0_97 = arith.constant 0 : index
    %127 = vector.load %arg12[%c0_96, %c0_97] : memref<1x8xf32, #tpu.memory_space<vmem>>, vector<1x8xf32>
    %128 = vector.broadcast %127 : vector<1x8xf32> to vector<16x8xf32>
    %129 = arith.addf %126, %128 : vector<16x8xf32>
    %130 = arith.addf %129, %6 : vector<16x8xf32>
    %cst_98 = arith.constant 0.000000e+00 : f32
    %131 = vector.broadcast %cst_98 : f32 to vector<16x8xf32>
    %132 = arith.maximumf %130, %131 : vector<16x8xf32>
    %c0_99 = arith.constant 0 : index
    %c0_100 = arith.constant 0 : index
    %c0_101 = arith.constant 0 : index
    %133 = vector.load %arg15[%c0_99, %c0_100, %c0_101] : memref<1x16x8xf32, #tpu.memory_space<vmem>>, vector<1x16x8xf32>
    %134 = vector.shape_cast %133 : vector<1x16x8xf32> to vector<16x8xf32>
    %135 = vector.shape_cast %132 : vector<16x8xf32> to vector<1x16x8xf32>
    tpu.vector_store %arg15[%c0_99, %c0_100, %c0_101], %135 {strides = array<i32>} : memref<1x16x8xf32, #tpu.memory_space<vmem>>, vector<1x16x8xf32>,
    return
  }
  func.func @transform_0(%arg0: i32) -> (i32, i32, i32) {
    %c0_i32 = arith.constant 0 : i32
    %c0_i32_0 = arith.constant 0 : i32
    %c0_i32_1 = arith.constant 0 : i32
    return %arg0, %c0_i32, %c0_i32_0 : i32, i32, i32
  }
  func.func @transform_1(%arg0: i32) -> (i32, i32) {
    %c0_i32 = arith.constant 0 : i32
    %c0_i32_0 = arith.constant 0 : i32
    %c0_i32_1 = arith.constant 0 : i32
    return %c0_i32, %c0_i32_0 : i32, i32
  }
  func.func @transform_2(%arg0: i32) -> (i32, i32, i32) {
    %c0_i32 = arith.constant 0 : i32
    %c0_i32_0 = arith.constant 0 : i32
    %c0_i32_1 = arith.constant 0 : i32
    %c0_i32_2 = arith.constant 0 : i32
    return %c0_i32, %c0_i32_0, %c0_i32_1 : i32, i32, i32
  }
  func.func @transform_3(%arg0: i32) -> (i32, i32) {
    %c0_i32 = arith.constant 0 : i32
    %c0_i32_0 = arith.constant 0 : i32
    %c0_i32_1 = arith.constant 0 : i32
    return %c0_i32, %c0_i32_0 : i32, i32
  }
  func.func @transform_4(%arg0: i32) -> (i32, i32) {
    %c0_i32 = arith.constant 0 : i32
    %c0_i32_0 = arith.constant 0 : i32
    %c0_i32_1 = arith.constant 0 : i32
    return %c0_i32, %c0_i32_0 : i32, i32
  }
  func.func @transform_5(%arg0: i32) -> (i32, i32, i32) {
    %c0_i32 = arith.constant 0 : i32
    %c0_i32_0 = arith.constant 0 : i32
    %c0_i32_1 = arith.constant 0 : i32
    %c0_i32_2 = arith.constant 0 : i32
    return %c0_i32, %c0_i32_0, %c0_i32_1 : i32, i32, i32
  }
  func.func @transform_6(%arg0: i32) -> (i32, i32) {
    %c0_i32 = arith.constant 0 : i32
    %c0_i32_0 = arith.constant 0 : i32
    %c0_i32_1 = arith.constant 0 : i32
    return %c0_i32, %c0_i32_0 : i32, i32
  }
  func.func @transform_7(%arg0: i32) -> (i32, i32) {
    %c0_i32 = arith.constant 0 : i32
    %c0_i32_0 = arith.constant 0 : i32
    %c0_i32_1 = arith.constant 0 : i32
    return %c0_i32, %c0_i32_0 : i32, i32
  }
  func.func @transform_8(%arg0: i32) -> (i32, i32, i32) {
    %c0_i32 = arith.constant 0 : i32
    %c0_i32_0 = arith.constant 0 : i32
    %c0_i32_1 = arith.constant 0 : i32
    %c0_i32_2 = arith.constant 0 : i32
    return %c0_i32, %c0_i32_0, %c0_i32_1 : i32, i32, i32
  }
  func.func @transform_9(%arg0: i32) -> (i32, i32) {
    %c0_i32 = arith.constant 0 : i32
    %c0_i32_0 = arith.constant 0 : i32
    %c0_i32_1 = arith.constant 0 : i32
    return %c0_i32, %c0_i32_0 : i32, i32
  }
  func.func @transform_10(%arg0: i32) -> (i32, i32) {
    %c0_i32 = arith.constant 0 : i32
    %c0_i32_0 = arith.constant 0 : i32
    %c0_i32_1 = arith.constant 0 : i32
    return %c0_i32, %c0_i32_0 : i32, i32
  }
  func.func @transform_11(%arg0: i32) -> (i32, i32) {
    %c0_i32 = arith.constant 0 : i32
    %c0_i32_0 = arith.constant 0 : i32
    %c0_i32_1 = arith.constant 0 : i32
    return %c0_i32, %c0_i32_0 : i32, i32
  }
  func.func @transform_12(%arg0: i32) -> (i32, i32) {
    %c0_i32 = arith.constant 0 : i32
    %c0_i32_0 = arith.constant 0 : i32
    %c0_i32_1 = arith.constant 0 : i32
    return %c0_i32, %c0_i32_0 : i32, i32
  }
  func.func @transform_13(%arg0: i32) -> (i32, i32) {
    %c0_i32 = arith.constant 0 : i32
    %c0_i32_0 = arith.constant 0 : i32
    %c0_i32_1 = arith.constant 0 : i32
    return %c0_i32, %c0_i32_0 : i32, i32
  }
  func.func @transform_14(%arg0: i32) -> (i32, i32, i32) {
    %c0_i32 = arith.constant 0 : i32
    %c0_i32_0 = arith.constant 0 : i32
    %c0_i32_1 = arith.constant 0 : i32
    return %arg0, %c0_i32, %c0_i32_0 : i32, i32, i32
  }
}

</mosaic_0001>

<llo_original>
// kernel: tpu_custom_call.1
$region0: #{tpu_custom_call.1}
  #allocation0 [shape = 'u32[]', space=smem, size = 0x4, offset = 0x4, fixed_abs, tag = 'smem constant byte address 0x4 - core index']
  #allocation1 [shape = 'u32[144,128]{1,0:T(1,128)}', space=vmem, size = 0x12000, scoped, tag = 'internal scratch']
  %s0 = inlined_call_operand.vmem [shape: f32[2,16,8], index: 0, kind: input, shape index: {}]
  %s1 = inlined_call_operand.vmem [shape: f32[8,4], index: 1, kind: input, shape index: {}]
  %s2 = inlined_call_operand.vmem [shape: f32[7,4,12], index: 2, kind: input, shape index: {}]
  %s3 = inlined_call_operand.vmem [shape: f32[1,12], index: 3, kind: input, shape index: {}]
  %s4 = inlined_call_operand.vmem [shape: f32[12,6], index: 4, kind: input, shape index: {}]
  %s5 = inlined_call_operand.vmem [shape: f32[7,6,12], index: 5, kind: input, shape index: {}]
  %s6 = inlined_call_operand.vmem [shape: f32[1,12], index: 6, kind: input, shape index: {}]
  %s7 = inlined_call_operand.vmem [shape: f32[12,6], index: 7, kind: input, shape index: {}]
  %s8 = inlined_call_operand.vmem [shape: f32[2,6,8], index: 8, kind: input, shape index: {}]
  %s9 = inlined_call_operand.vmem [shape: f32[1,8], index: 9, kind: input, shape index: {}]
  %s10 = inlined_call_operand.vmem [shape: f32[8,8], index: 10, kind: input, shape index: {}]
  %s11 = inlined_call_operand.vmem [shape: f32[1,8], index: 11, kind: input, shape index: {}]
  %s12 = inlined_call_operand.vmem [shape: f32[8,8], index: 12, kind: input, shape index: {}]
  %s13 = inlined_call_operand.vmem [shape: f32[1,8], index: 13, kind: input, shape index: {}]
  %s14 = inlined_call_operand.vmem [shape: f32[2,16,8], index: 14, kind: output, shape index: {}]
  %s15 = sld [smem:[#allocation0]]
  $region89: #{tpu_custom_call.1} parent=0
    _
  %s17 = ssub.s32 1, %s15
  %s18 = scalar_select 0, %s17, %s15
  loop: start=0, step=1, limit=4
  $region2: #{tpu_custom_call.1} parent=0 // loop_pre_header
    _
  $region3: #{tpu_custom_call.1} parent=0 // loop_header
    %s20 = sphi 0, %s24
    %p21 = scmp.ge.s32.totalorder %s20, 4
    %s30 = sphi 0, %s32
    %s33 = sphi 0, %s30
    %s34 = sphi 0, %s33
    %s50 = sphi 0, %s34
    %s54 = sphi 0, %s54
    %s56 = sphi 0, %s54
    %s57 = sphi 0, %s56
    %s71 = sphi 0, %s57
    %s75 = sphi 0, %s75
    %s77 = sphi 0, %s75
    %s78 = sphi 0, %s77
    %s92 = sphi 0, %s78
    %s96 = sphi 0, %s96
    %s98 = sphi 0, %s96
    %s99 = sphi 0, %s98
    %s113 = sphi 0, %s99
    %s117 = sphi 0, %s117
    %s119 = sphi 0, %s117
    %s120 = sphi 0, %s119
    %s134 = sphi 0, %s120
    %s138 = sphi 0, %s138
    %s140 = sphi 0, %s138
    %s141 = sphi 0, %s140
    %s155 = sphi 0, %s141
    %s159 = sphi 0, %s159
    %s161 = sphi 0, %s159
    %s162 = sphi 0, %s161
    %s176 = sphi 0, %s162
    %s180 = sphi 0, %s180
    %s182 = sphi 0, %s180
    %s183 = sphi 0, %s182
    %s197 = sphi 0, %s183
    %s201 = sphi 0, %s201
    %s203 = sphi 0, %s201
    %s204 = sphi 0, %s203
    %s218 = sphi 0, %s204
    %s222 = sphi 0, %s222
    %s224 = sphi 0, %s222
    %s225 = sphi 0, %s224
    %s239 = sphi 0, %s225
    %s243 = sphi 0, %s243
    %s245 = sphi 0, %s243
    %s246 = sphi 0, %s245
    %s260 = sphi 0, %s246
    %s264 = sphi 0, %s264
    %s266 = sphi 0, %s264
    %s267 = sphi 0, %s266
    %s281 = sphi 0, %s267
    %s285 = sphi 0, %s285
    %s287 = sphi 0, %s285
    %s288 = sphi 0, %s287
    %s302 = sphi 0, %s288
    %s306 = sphi 0, %s306
    %s308 = sphi 0, %s306
    %s309 = sphi 0, %s308
    %s323 = sphi 0, %s309
    %s329 = sphi 0, %s331
    %s332 = sphi 0, %s329
    %s333 = sphi 0, %s332
    %s349 = sphi 0, %s333
  $region4: #{tpu_custom_call.1} parent=0 // loop_header_branch
    %23 = sbr.rel (%p21) target = $region8
  $region5: #{tpu_custom_call.1} parent=0 // loop_body
    %s25 = ssub.s32 %s20, 1
    %s26 = ssub.s32 %s20, 2
    %s27 = sadd.s32 %s20, 1
    %s28 = ssub.s32 %s20, %s27
    %p29 = scmp.eq.s32.totalorder %s28, 0
    %s31 = sadd.s32 %s30, 1
    %s32 = scalar_select %p29, %s30, %s31
    %p35 = pneg %p29
    %p36 = scmp.eq.s32.totalorder %s20, 1
    %p37 = por %p35, %p36
    %p38 = scmp.ne.s32.totalorder %s30, %s33
    %p39 = scmp.eq.s32.totalorder %s20, 0
    %p40 = por %p38, %p39
    %p41 = scmp.ne.s32.totalorder %s30, %s33
    %p42 = scmp.eq.s32.totalorder %s25, 1
    %p43 = por %p41, %p42
    %p44 = scmp.ne.s32.totalorder %s33, %s34
    %p45 = scmp.eq.s32.totalorder %s25, 0
    %p46 = por %p44, %p45
    %p47 = scmp.ne.s32.totalorder %s33, %s34
    %p48 = scmp.eq.s32.totalorder %s26, 1
    %p49 = por %p47, %p48
    %p51 = scmp.ne.s32.totalorder %s34, %s50
    %p52 = scmp.eq.s32.totalorder %s26, 0
    %p53 = por %p51, %p52
    %s55 = sadd.s32 %s54, 1
    %p58 = scmp.eq.s32.totalorder %s20, 1
    %p59 = scmp.ne.s32.totalorder %s54, %s56
    %p60 = scmp.eq.s32.totalorder %s20, 0
    %p61 = por %p59, %p60
    %p62 = scmp.ne.s32.totalorder %s54, %s56
    %p63 = scmp.eq.s32.totalorder %s25, 1
    %p64 = por %p62, %p63
    %p65 = scmp.ne.s32.totalorder %s56, %s57
    %p66 = scmp.eq.s32.totalorder %s25, 0
    %p67 = por %p65, %p66
    %p68 = scmp.ne.s32.totalorder %s56, %s57
    %p69 = scmp.eq.s32.totalorder %s26, 1
    %p70 = por %p68, %p69
    %p72 = scmp.ne.s32.totalorder %s57, %s71
    %p73 = scmp.eq.s32.totalorder %s26, 0
    %p74 = por %p72, %p73
    %s76 = sadd.s32 %s75, 1
    %p79 = scmp.eq.s32.totalorder %s20, 1
    %p80 = scmp.ne.s32.totalorder %s75, %s77
    %p81 = scmp.eq.s32.totalorder %s20, 0
    %p82 = por %p80, %p81
    %p83 = scmp.ne.s32.totalorder %s75, %s77
    %p84 = scmp.eq.s32.totalorder %s25, 1
    %p85 = por %p83, %p84
    %p86 = scmp.ne.s32.totalorder %s77, %s78
    %p87 = scmp.eq.s32.totalorder %s25, 0
    %p88 = por %p86, %p87
    %p89 = scmp.ne.s32.totalorder %s77, %s78
    %p90 = scmp.eq.s32.totalorder %s26, 1
    %p91 = por %p89, %p90
    %p93 = scmp.ne.s32.totalorder %s78, %s92
    %p94 = scmp.eq.s32.totalorder %s26, 0
    %p95 = por %p93, %p94
    %s97 = sadd.s32 %s96, 1
    %p100 = scmp.eq.s32.totalorder %s20, 1
    %p101 = scmp.ne.s32.totalorder %s96, %s98
    %p102 = scmp.eq.s32.totalorder %s20, 0
    %p103 = por %p101, %p102
    %p104 = scmp.ne.s32.totalorder %s96, %s98
    %p105 = scmp.eq.s32.totalorder %s25, 1
    %p106 = por %p104, %p105
    %p107 = scmp.ne.s32.totalorder %s98, %s99
    %p108 = scmp.eq.s32.totalorder %s25, 0
    %p109 = por %p107, %p108
    %p110 = scmp.ne.s32.totalorder %s98, %s99
    %p111 = scmp.eq.s32.totalorder %s26, 1
    %p112 = por %p110, %p111
    %p114 = scmp.ne.s32.totalorder %s99, %s113
    %p115 = scmp.eq.s32.totalorder %s26, 0
    %p116 = por %p114, %p115
    %s118 = sadd.s32 %s117, 1
    %p121 = scmp.eq.s32.totalorder %s20, 1
    %p122 = scmp.ne.s32.totalorder %s117, %s119
    %p123 = scmp.eq.s32.totalorder %s20, 0
    %p124 = por %p122, %p123
    %p125 = scmp.ne.s32.totalorder %s117, %s119
    %p126 = scmp.eq.s32.totalorder %s25, 1
    %p127 = por %p125, %p126
    %p128 = scmp.ne.s32.totalorder %s119, %s120
    %p129 = scmp.eq.s32.totalorder %s25, 0
    %p130 = por %p128, %p129
    %p131 = scmp.ne.s32.totalorder %s119, %s120
    %p132 = scmp.eq.s32.totalorder %s26, 1
    %p133 = por %p131, %p132
    %p135 = scmp.ne.s32.totalorder %s120, %s134
    %p136 = scmp.eq.s32.totalorder %s26, 0
    %p137 = por %p135, %p136
    %s139 = sadd.s32 %s138, 1
    %p142 = scmp.eq.s32.totalorder %s20, 1
    %p143 = scmp.ne.s32.totalorder %s138, %s140
    %p144 = scmp.eq.s32.totalorder %s20, 0
    %p145 = por %p143, %p144
    %p146 = scmp.ne.s32.totalorder %s138, %s140
    %p147 = scmp.eq.s32.totalorder %s25, 1
    %p148 = por %p146, %p147
    %p149 = scmp.ne.s32.totalorder %s140, %s141
    %p150 = scmp.eq.s32.totalorder %s25, 0
    %p151 = por %p149, %p150
    %p152 = scmp.ne.s32.totalorder %s140, %s141
    %p153 = scmp.eq.s32.totalorder %s26, 1
    %p154 = por %p152, %p153
    %p156 = scmp.ne.s32.totalorder %s141, %s155
    %p157 = scmp.eq.s32.totalorder %s26, 0
    %p158 = por %p156, %p157
    %s160 = sadd.s32 %s159, 1
    %p163 = scmp.eq.s32.totalorder %s20, 1
    %p164 = scmp.ne.s32.totalorder %s159, %s161
    %p165 = scmp.eq.s32.totalorder %s20, 0
    %p166 = por %p164, %p165
    %p167 = scmp.ne.s32.totalorder %s159, %s161
    %p168 = scmp.eq.s32.totalorder %s25, 1
    %p169 = por %p167, %p168
    %p170 = scmp.ne.s32.totalorder %s161, %s162
    %p171 = scmp.eq.s32.totalorder %s25, 0
    %p172 = por %p170, %p171
    %p173 = scmp.ne.s32.totalorder %s161, %s162
    %p174 = scmp.eq.s32.totalorder %s26, 1
    %p175 = por %p173, %p174
    %p177 = scmp.ne.s32.totalorder %s162, %s176
    %p178 = scmp.eq.s32.totalorder %s26, 0
    %p179 = por %p177, %p178
    %s181 = sadd.s32 %s180, 1
    %p184 = scmp.eq.s32.totalorder %s20, 1
    %p185 = scmp.ne.s32.totalorder %s180, %s182
    %p186 = scmp.eq.s32.totalorder %s20, 0
    %p187 = por %p185, %p186
    %p188 = scmp.ne.s32.totalorder %s180, %s182
    %p189 = scmp.eq.s32.totalorder %s25, 1
    %p190 = por %p188, %p189
    %p191 = scmp.ne.s32.totalorder %s182, %s183
    %p192 = scmp.eq.s32.totalorder %s25, 0
    %p193 = por %p191, %p192
    %p194 = scmp.ne.s32.totalorder %s182, %s183
    %p195 = scmp.eq.s32.totalorder %s26, 1
    %p196 = por %p194, %p195
    %p198 = scmp.ne.s32.totalorder %s183, %s197
    %p199 = scmp.eq.s32.totalorder %s26, 0
    %p200 = por %p198, %p199
    %s202 = sadd.s32 %s201, 1
    %p205 = scmp.eq.s32.totalorder %s20, 1
    %p206 = scmp.ne.s32.totalorder %s201, %s203
    %p207 = scmp.eq.s32.totalorder %s20, 0
    %p208 = por %p206, %p207
    %p209 = scmp.ne.s32.totalorder %s201, %s203
    %p210 = scmp.eq.s32.totalorder %s25, 1
    %p211 = por %p209, %p210
    %p212 = scmp.ne.s32.totalorder %s203, %s204
    %p213 = scmp.eq.s32.totalorder %s25, 0
    %p214 = por %p212, %p213
    %p215 = scmp.ne.s32.totalorder %s203, %s204
    %p216 = scmp.eq.s32.totalorder %s26, 1
    %p217 = por %p215, %p216
    %p219 = scmp.ne.s32.totalorder %s204, %s218
    %p220 = scmp.eq.s32.totalorder %s26, 0
    %p221 = por %p219, %p220
    %s223 = sadd.s32 %s222, 1
    %p226 = scmp.eq.s32.totalorder %s20, 1
    %p227 = scmp.ne.s32.totalorder %s222, %s224
    %p228 = scmp.eq.s32.totalorder %s20, 0
    %p229 = por %p227, %p228
    %p230 = scmp.ne.s32.totalorder %s222, %s224
    %p231 = scmp.eq.s32.totalorder %s25, 1
    %p232 = por %p230, %p231
    %p233 = scmp.ne.s32.totalorder %s224, %s225
    %p234 = scmp.eq.s32.totalorder %s25, 0
    %p235 = por %p233, %p234
    %p236 = scmp.ne.s32.totalorder %s224, %s225
    %p237 = scmp.eq.s32.totalorder %s26, 1
    %p238 = por %p236, %p237
    %p240 = scmp.ne.s32.totalorder %s225, %s239
    %p241 = scmp.eq.s32.totalorder %s26, 0
    %p242 = por %p240, %p241
    %s244 = sadd.s32 %s243, 1
    %p247 = scmp.eq.s32.totalorder %s20, 1
    %p248 = scmp.ne.s32.totalorder %s243, %s245
    %p249 = scmp.eq.s32.totalorder %s20, 0
    %p250 = por %p248, %p249
    %p251 = scmp.ne.s32.totalorder %s243, %s245
    %p252 = scmp.eq.s32.totalorder %s25, 1
    %p253 = por %p251, %p252
    %p254 = scmp.ne.s32.totalorder %s245, %s246
    %p255 = scmp.eq.s32.totalorder %s25, 0
    %p256 = por %p254, %p255
    %p257 = scmp.ne.s32.totalorder %s245, %s246
    %p258 = scmp.eq.s32.totalorder %s26, 1
    %p259 = por %p257, %p258
    %p261 = scmp.ne.s32.totalorder %s246, %s260
    %p262 = scmp.eq.s32.totalorder %s26, 0
    %p263 = por %p261, %p262
    %s265 = sadd.s32 %s264, 1
    %p268 = scmp.eq.s32.totalorder %s20, 1
    %p269 = scmp.ne.s32.totalorder %s264, %s266
    %p270 = scmp.eq.s32.totalorder %s20, 0
    %p271 = por %p269, %p270
    %p272 = scmp.ne.s32.totalorder %s264, %s266
    %p273 = scmp.eq.s32.totalorder %s25, 1
    %p274 = por %p272, %p273
    %p275 = scmp.ne.s32.totalorder %s266, %s267
    %p276 = scmp.eq.s32.totalorder %s25, 0
    %p277 = por %p275, %p276
    %p278 = scmp.ne.s32.totalorder %s266, %s267
    %p279 = scmp.eq.s32.totalorder %s26, 1
    %p280 = por %p278, %p279
    %p282 = scmp.ne.s32.totalorder %s267, %s281
    %p283 = scmp.eq.s32.totalorder %s26, 0
    %p284 = por %p282, %p283
    %s286 = sadd.s32 %s285, 1
    %p289 = scmp.eq.s32.totalorder %s20, 1
    %p290 = scmp.ne.s32.totalorder %s285, %s287
    %p291 = scmp.eq.s32.totalorder %s20, 0
    %p292 = por %p290, %p291
    %p293 = scmp.ne.s32.totalorder %s285, %s287
    %p294 = scmp.eq.s32.totalorder %s25, 1
    %p295 = por %p293, %p294
    %p296 = scmp.ne.s32.totalorder %s287, %s288
    %p297 = scmp.eq.s32.totalorder %s25, 0
    %p298 = por %p296, %p297
    %p299 = scmp.ne.s32.totalorder %s287, %s288
    %p300 = scmp.eq.s32.totalorder %s26, 1
    %p301 = por %p299, %p300
    %p303 = scmp.ne.s32.totalorder %s288, %s302
    %p304 = scmp.eq.s32.totalorder %s26, 0
    %p305 = por %p303, %p304
    %s307 = sadd.s32 %s306, 1
    %p310 = scmp.eq.s32.totalorder %s20, 1
    %p311 = scmp.ne.s32.totalorder %s306, %s308
    %p312 = scmp.eq.s32.totalorder %s20, 0
    %p313 = por %p311, %p312
    %p314 = scmp.ne.s32.totalorder %s306, %s308
    %p315 = scmp.eq.s32.totalorder %s25, 1
    %p316 = por %p314, %p315
    %p317 = scmp.ne.s32.totalorder %s308, %s309
    %p318 = scmp.eq.s32.totalorder %s25, 0
    %p319 = por %p317, %p318
    %p320 = scmp.ne.s32.totalorder %s308, %s309
    %p321 = scmp.eq.s32.totalorder %s26, 1
    %p322 = por %p320, %p321
    %p324 = scmp.ne.s32.totalorder %s309, %s323
    %p325 = scmp.eq.s32.totalorder %s26, 0
    %p326 = por %p324, %p325
    %s327 = ssub.s32 %s20, %s27
    %p328 = scmp.eq.s32.totalorder %s327, 0
    %s330 = sadd.s32 %s329, 1
    %s331 = scalar_select %p328, %s329, %s330
    %p334 = pneg %p328
    %p335 = scmp.eq.s32.totalorder %s20, 1
    %p336 = por %p334, %p335
    %p337 = scmp.ne.s32.totalorder %s329, %s332
    %p338 = scmp.eq.s32.totalorder %s20, 0
    %p339 = por %p337, %p338
    %p340 = scmp.ne.s32.totalorder %s329, %s332
    %p341 = scmp.eq.s32.totalorder %s25, 1
    %p342 = por %p340, %p341
    %p343 = scmp.ne.s32.totalorder %s332, %s333
    %p344 = scmp.eq.s32.totalorder %s25, 0
    %p345 = por %p343, %p344
    %p346 = scmp.ne.s32.totalorder %s332, %s333
    %p347 = scmp.eq.s32.totalorder %s26, 1
    %p348 = por %p346, %p347
    %p350 = scmp.ne.s32.totalorder %s333, %s349
    %p351 = scmp.eq.s32.totalorder %s26, 0
    %p352 = por %p350, %p351
    %p353 = scmp.le.s32.totalorder 1, %s20
    %p354 = scmp.lt.s32.totalorder %s20, 3
    %p355 = pnand %p353, %p354
    %p356 = pneg %p355
    // Predicated region
    $region9: #{tpu_custom_call.1} parent=5 // pred_check
      _
    $region10: #{tpu_custom_call.1} parent=5 // pred_check_branch
      %358 = sbr.rel (%p355) target = $region12
    $region11: #{tpu_custom_call.1} parent=5 // pred_region
      %s359 = ssub.s32 %s20, 1
      // Predicated region
      $region13: #{tpu_custom_call.1} parent=11 // pred_check
        %p360 = pneg %p67
      $region14: #{tpu_custom_call.1} parent=11 // pred_check_branch
        %362 = sbr.rel (%p360) target = $region16
      $region15: #{tpu_custom_call.1} parent=11 // pred_region
        _
      $region16: #{tpu_custom_call.1} parent=11 // pred_fallthru
        _
      // Predicated region
      $region17: #{tpu_custom_call.1} parent=11 // pred_check
        %p363 = pneg %p88
      $region18: #{tpu_custom_call.1} parent=11 // pred_check_branch
        %365 = sbr.rel (%p363) target = $region20
      $region19: #{tpu_custom_call.1} parent=11 // pred_region
        _
      $region20: #{tpu_custom_call.1} parent=11 // pred_fallthru
        _
      // Predicated region
      $region21: #{tpu_custom_call.1} parent=11 // pred_check
        %p366 = pneg %p109
      $region22: #{tpu_custom_call.1} parent=11 // pred_check_branch
        %368 = sbr.rel (%p366) target = $region24
      $region23: #{tpu_custom_call.1} parent=11 // pred_region
        _
      $region24: #{tpu_custom_call.1} parent=11 // pred_fallthru
        _
      // Predicated region
      $region25: #{tpu_custom_call.1} parent=11 // pred_check
        %p369 = pneg %p130
      $region26: #{tpu_custom_call.1} parent=11 // pred_check_branch
        %371 = sbr.rel (%p369) target = $region28
      $region27: #{tpu_custom_call.1} parent=11 // pred_region
        _
      $region28: #{tpu_custom_call.1} parent=11 // pred_fallthru
        _
      // Predicated region
      $region29: #{tpu_custom_call.1} parent=11 // pred_check
        %p372 = pneg %p151
      $region30: #{tpu_custom_call.1} parent=11 // pred_check_branch
        %374 = sbr.rel (%p372) target = $region32
      $region31: #{tpu_custom_call.1} parent=11 // pred_region
        _
      $region32: #{tpu_custom_call.1} parent=11 // pred_fallthru
        _
      // Predicated region
      $region33: #{tpu_custom_call.1} parent=11 // pred_check
        %p375 = pneg %p172
      $region34: #{tpu_custom_call.1} parent=11 // pred_check_branch
        %377 = sbr.rel (%p375) target = $region36
      $region35: #{tpu_custom_call.1} parent=11 // pred_region
        _
      $region36: #{tpu_custom_call.1} parent=11 // pred_fallthru
        _
      // Predicated region
      $region37: #{tpu_custom_call.1} parent=11 // pred_check
        %p378 = pneg %p193
      $region38: #{tpu_custom_call.1} parent=11 // pred_check_branch
        %380 = sbr.rel (%p378) target = $region40
      $region39: #{tpu_custom_call.1} parent=11 // pred_region
        _
      $region40: #{tpu_custom_call.1} parent=11 // pred_fallthru
        _
      // Predicated region
      $region41: #{tpu_custom_call.1} parent=11 // pred_check
        %p381 = pneg %p214
      $region42: #{tpu_custom_call.1} parent=11 // pred_check_branch
        %383 = sbr.rel (%p381) target = $region44
      $region43: #{tpu_custom_call.1} parent=11 // pred_region
        _
      $region44: #{tpu_custom_call.1} parent=11 // pred_fallthru
        _
      // Predicated region
      $region45: #{tpu_custom_call.1} parent=11 // pred_check
        %p384 = pneg %p235
      $region46: #{tpu_custom_call.1} parent=11 // pred_check_branch
        %386 = sbr.rel (%p384) target = $region48
      $region47: #{tpu_custom_call.1} parent=11 // pred_region
        _
      $region48: #{tpu_custom_call.1} parent=11 // pred_fallthru
        _
      // Predicated region
      $region49: #{tpu_custom_call.1} parent=11 // pred_check
        %p387 = pneg %p256
      $region50: #{tpu_custom_call.1} parent=11 // pred_check_branch
        %389 = sbr.rel (%p387) target = $region52
      $region51: #{tpu_custom_call.1} parent=11 // pred_region
        _
      $region52: #{tpu_custom_call.1} parent=11 // pred_fallthru
        _
      // Predicated region
      $region53: #{tpu_custom_call.1} parent=11 // pred_check
        %p390 = pneg %p277
      $region54: #{tpu_custom_call.1} parent=11 // pred_check_branch
        %392 = sbr.rel (%p390) target = $region56
      $region55: #{tpu_custom_call.1} parent=11 // pred_region
        _
      $region56: #{tpu_custom_call.1} parent=11 // pred_fallthru
        _
      // Predicated region
      $region57: #{tpu_custom_call.1} parent=11 // pred_check
        %p393 = pneg %p298
      $region58: #{tpu_custom_call.1} parent=11 // pred_check_branch
        %395 = sbr.rel (%p393) target = $region60
      $region59: #{tpu_custom_call.1} parent=11 // pred_region
        _
      $region60: #{tpu_custom_call.1} parent=11 // pred_fallthru
        _
      // Predicated region
      $region61: #{tpu_custom_call.1} parent=11 // pred_check
        %p396 = pneg %p319
      $region62: #{tpu_custom_call.1} parent=11 // pred_check_branch
        %398 = sbr.rel (%p396) target = $region64
      $region63: #{tpu_custom_call.1} parent=11 // pred_region
        _
      $region64: #{tpu_custom_call.1} parent=11 // pred_fallthru
        _
    $region12: #{tpu_custom_call.1} parent=5 // pred_fallthru
      _
    %p399 = scmp.lt.s32.totalorder %s20, 2
    // Predicated region
    $region65: #{tpu_custom_call.1} parent=5 // pred_check
      %p400 = pneg %p399
    $region66: #{tpu_custom_call.1} parent=5 // pred_check_branch
      %402 = sbr.rel (%p400) target = $region68
    $region67: #{tpu_custom_call.1} parent=5 // pred_region
      // Predicated region
      $region69: #{tpu_custom_call.1} parent=67 // pred_check
        %p403 = pneg %p40
      $region70: #{tpu_custom_call.1} parent=67 // pred_check_branch
        %405 = sbr.rel (%p403) target = $region72
      $region71: #{tpu_custom_call.1} parent=67 // pred_region
        %p406 = scmp.lt.s32.totalorder %s20, 1
        %s407 = scalar_select %p406, %s20, 1
        %s408 = smul.addr %s407, 2
        %s409 = smul.addr %s408, 8
        %s410 = scalar_lea.vmem %s0, %s409
      $region72: #{tpu_custom_call.1} parent=67 // pred_fallthru
        _
    $region68: #{tpu_custom_call.1} parent=5 // pred_fallthru
      _
    %p411 = scmp.le.s32.totalorder 1, %s20
    %p412 = scmp.lt.s32.totalorder %s20, 3
    %p413 = pnand %p411, %p412
    %p414 = pneg %p413
    // Predicated region
    $region73: #{tpu_custom_call.1} parent=5 // pred_check
      _
    $region74: #{tpu_custom_call.1} parent=5 // pred_check_branch
      %416 = sbr.rel (%p413) target = $region76
    $region75: #{tpu_custom_call.1} parent=5 // pred_region
      %s417 = ssub.s32 %s20, 1
      %p418 = scmp.lt.s32.totalorder %s25, 1
      %s419 = scalar_select %p418, %s25, 1
      %s420 = smul.addr %s419, 2
      %s421 = smul.addr %s420, 8
      %s422 = scalar_lea.vmem %s0, %s421
      %p423 = pneg %p46
      %p424 = pneg %p43
      %p425 = pneg %p67
      %p426 = pneg %p64
      %p427 = pneg %p88
      %p428 = pneg %p85
      %p429 = pneg %p109
      %p430 = pneg %p106
      %p431 = pneg %p130
      %p432 = pneg %p127
      %p433 = pneg %p151
      %p434 = pneg %p148
      %p435 = pneg %p172
      %p436 = pneg %p169
      %p437 = pneg %p193
      %p438 = pneg %p190
      %p439 = pneg %p214
      %p440 = pneg %p211
      %p441 = pneg %p235
      %p442 = pneg %p232
      %p443 = pneg %p256
      %p444 = pneg %p253
      %p445 = pneg %p277
      %p446 = pneg %p274
      %p447 = pneg %p298
      %p448 = pneg %p295
      %p449 = pneg %p319
      %p450 = pneg %p316
      %p451 = pneg %p345
      %p452 = pneg %p342
      %p453 = scmp.lt.s32.totalorder %s25, 1
      %s454 = scalar_select %p453, %s25, 1
      %s455 = smul.addr %s454, 2
      %s456 = smul.addr %s455, 8
      %s457 = scalar_lea.vmem %s14, %s456
      %p458 = scmp.lt.s32.totalorder %s25, 1
      %s459 = scalar_select %p458, %s25, 1
      %s460 = smul.addr %s459, 2
      %s461 = smul.addr %s460, 8
      %s462 = scalar_lea.vmem %s0, %s461
      %p463 = scmp.lt.s32.totalorder %s25, 1
      %s464 = scalar_select %p463, %s25, 1
      %s465 = smul.addr %s464, 2
      %s466 = smul.addr %s465, 8
      %s467 = scalar_lea.vmem %s14, %s466
      %v468 = vld [vmem:[%s462] sm:$0xff]
      %v469 = vld [vmem:[%s462 + $0x8] sm:$0xff]
      %v470 = vld [vmem:[%s12] sm:$0xff]
      %v471 = vld [vmem:[%s13] sm:$0x1]
      %v473 = vlaneseq
      %v474 = vshrl.u32 %v473, 7
      %v475 = vsub.s32 0, %v474
      %v476 = vrot.slane %v471, %v475
      %vm478 = vcmask 64512
      %v480 = vsel %vm478, %v468, 0
      %v483 = vsel %vm478, %v469, 0
      %485 = vmatprep.subr.mxu0 0.0
      %486 = vmatpush1.msra.mxu0 0.0
      %487 = vmatprep.subr.mxu0 0.0
      %488 = vmatpush1.msra.mxu0 0.0
      %489 = vmatprep.subr.mxu0 0.0
      %490 = vmatpush1.msra.mxu0 0.0
      %491 = vmatprep.subr.mxu0 0.0
      %492 = vmatpush1.msra.mxu0 0.0
      %493 = vmatprep.subr.mxu0 0.0
      %494 = vmatpush1.msra.mxu0 0.0
      %495 = vmatprep.subr.mxu0 0.0
      %496 = vmatpush1.msra.mxu0 0.0
      %497 = vmatprep.subr.mxu0 0.0
      %498 = vmatpush1.msra.mxu0 0.0
      %499 = vmatprep.subr.mxu0 0.0
      %500 = vmatpush1.msra.mxu0 0.0
      %501 = vmatprep.subr.mxu0 0.0
      %502 = vmatpush1.msra.mxu0 0.0
      %503 = vmatprep.subr.mxu0 0.0
      %504 = vmatpush1.msra.mxu0 0.0
      %505 = vmatprep.subr.mxu0 0.0
      %506 = vmatpush1.msra.mxu0 0.0
      %507 = vmatprep.subr.mxu0 0.0
      %508 = vmatpush1.msra.mxu0 0.0
      %509 = vmatprep.subr.mxu0 0.0
      %510 = vmatpush1.msra.mxu0 0.0
      %511 = vmatprep.subr.mxu0 0.0
      %512 = vmatpush1.msra.mxu0 0.0
      %513 = vmatprep.subr.mxu0 0.0
      %514 = vmatpush1.msra.mxu0 0.0
      %515 = vmatprep.subr.mxu0 0.0
      %516 = vmatpush1.msra.mxu0 %v470
      %517 = vmatprep.subr.mxu0 0.0
      %518 = vmatpush2.msra.mxu0 0.0
      %519 = vmatprep.subr.mxu0 0.0
      %520 = vmatpush2.msra.mxu0 0.0
      %521 = vmatprep.subr.mxu0 0.0
      %522 = vmatpush2.msra.mxu0 0.0
      %523 = vmatprep.subr.mxu0 0.0
      %524 = vmatpush2.msra.mxu0 0.0
      %525 = vmatprep.subr.mxu0 0.0
      %526 = vmatpush2.msra.mxu0 0.0
      %527 = vmatprep.subr.mxu0 0.0
      %528 = vmatpush2.msra.mxu0 0.0
      %529 = vmatprep.subr.mxu0 0.0
      %530 = vmatpush2.msra.mxu0 0.0
      %531 = vmatprep.subr.mxu0 0.0
      %532 = vmatpush2.msra.mxu0 0.0
      %533 = vmatprep.subr.mxu0 0.0
      %534 = vmatpush2.msra.mxu0 0.0
      %535 = vmatprep.subr.mxu0 0.0
      %536 = vmatpush2.msra.mxu0 0.0
      %537 = vmatprep.subr.mxu0 0.0
      %538 = vmatpush2.msra.mxu0 0.0
      %539 = vmatprep.subr.mxu0 0.0
      %540 = vmatpush2.msra.mxu0 0.0
      %541 = vmatprep.subr.mxu0 0.0
      %542 = vmatpush2.msra.mxu0 0.0
      %543 = vmatprep.subr.mxu0 0.0
      %544 = vmatpush2.msra.mxu0 0.0
      %545 = vmatprep.subr.mxu0 0.0
      %546 = vmatpush2.msra.mxu0 0.0
      %547 = vmatprep.subr.mxu0 0.0
      %548 = vmatpush2.msra.mxu0 0.0
      %549 = vmatprep.mubr.f32.mxu0 0.0
      %550 = vmatmul.mubr.f32.gmra.mxu0 %v480
      %v551 = vpop.f32.mrf.mxu0
      %v552 = vadd.f32 %v476, %v551
      %v553 = vpop.f32.mrf.mxu0
      %554 = vmatprep.mubr.f32.mxu0 0.0
      %555 = vmatmul.mubr.f32.gmra.mxu0 %v483
      %v556 = vpop.f32.mrf.mxu0
      %v557 = vadd.f32 %v476, %v556
      %v558 = vpop.f32.mrf.mxu0
      %559 = vdwg.mxu0
      %v560 = vld [vmem:[%s1] sm:$0xff]
      %561 = vmatprep.subr.mxu0 0.0
      %562 = vmatpush1.msra.mxu0 0.0
      %563 = vmatprep.subr.mxu0 0.0
      %564 = vmatpush1.msra.mxu0 0.0
      %565 = vmatprep.subr.mxu0 0.0
      %566 = vmatpush1.msra.mxu0 0.0
      %567 = vmatprep.subr.mxu0 0.0
      %568 = vmatpush1.msra.mxu0 0.0
      %569 = vmatprep.subr.mxu0 0.0
      %570 = vmatpush1.msra.mxu0 0.0
      %571 = vmatprep.subr.mxu0 0.0
      %572 = vmatpush1.msra.mxu0 0.0
      %573 = vmatprep.subr.mxu0 0.0
      %574 = vmatpush1.msra.mxu0 0.0
      %575 = vmatprep.subr.mxu0 0.0
      %576 = vmatpush1.msra.mxu0 0.0
      %577 = vmatprep.subr.mxu0 0.0
      %578 = vmatpush1.msra.mxu0 0.0
      %579 = vmatprep.subr.mxu0 0.0
      %580 = vmatpush1.msra.mxu0 0.0
      %581 = vmatprep.subr.mxu0 0.0
      %582 = vmatpush1.msra.mxu0 0.0
      %583 = vmatprep.subr.mxu0 0.0
      %584 = vmatpush1.msra.mxu0 0.0
      %585 = vmatprep.subr.mxu0 0.0
      %586 = vmatpush1.msra.mxu0 0.0
      %587 = vmatprep.subr.mxu0 0.0
      %588 = vmatpush1.msra.mxu0 0.0
      %589 = vmatprep.subr.mxu0 0.0
      %590 = vmatpush1.msra.mxu0 0.0
      %591 = vmatprep.subr.mxu0 0.0
      %592 = vmatpush1.msra.mxu0 %v560
      %593 = vmatprep.subr.mxu0 0.0
      %594 = vmatpush2.msra.mxu0 0.0
      %595 = vmatprep.subr.mxu0 0.0
      %596 = vmatpush2.msra.mxu0 0.0
      %597 = vmatprep.subr.mxu0 0.0
      %598 = vmatpush2.msra.mxu0 0.0
      %599 = vmatprep.subr.mxu0 0.0
      %600 = vmatpush2.msra.mxu0 0.0
      %601 = vmatprep.subr.mxu0 0.0
      %602 = vmatpush2.msra.mxu0 0.0
      %603 = vmatprep.subr.mxu0 0.0
      %604 = vmatpush2.msra.mxu0 0.0
      %605 = vmatprep.subr.mxu0 0.0
      %606 = vmatpush2.msra.mxu0 0.0
      %607 = vmatprep.subr.mxu0 0.0
      %608 = vmatpush2.msra.mxu0 0.0
      %609 = vmatprep.subr.mxu0 0.0
      %610 = vmatpush2.msra.mxu0 0.0
      %611 = vmatprep.subr.mxu0 0.0
      %612 = vmatpush2.msra.mxu0 0.0
      %613 = vmatprep.subr.mxu0 0.0
      %614 = vmatpush2.msra.mxu0 0.0
      %615 = vmatprep.subr.mxu0 0.0
      %616 = vmatpush2.msra.mxu0 0.0
      %617 = vmatprep.subr.mxu0 0.0
      %618 = vmatpush2.msra.mxu0 0.0
      %619 = vmatprep.subr.mxu0 0.0
      %620 = vmatpush2.msra.mxu0 0.0
      %621 = vmatprep.subr.mxu0 0.0
      %622 = vmatpush2.msra.mxu0 0.0
      %623 = vmatprep.subr.mxu0 0.0
      %624 = vmatpush2.msra.mxu0 0.0
      %625 = vmatprep.mubr.f32.mxu0 0.0
      %626 = vmatmul.mubr.f32.gmra.mxu0 %v480
      %v627 = vpop.f32.mrf.mxu0
      %v628 = vadd.f32 0.0, %v627
      %v629 = vpop.f32.mrf.mxu0
      %630 = vmatprep.mubr.f32.mxu0 0.0
      %631 = vmatmul.mubr.f32.gmra.mxu0 %v483
      %v632 = vpop.f32.mrf.mxu0
      %v633 = vadd.f32 0.0, %v632
      %v634 = vpop.f32.mrf.mxu0
      %635 = vdwg.mxu0
      %v636 = vmax.f32 %v628, 0.0
      %v637 = vmax.f32 %v633, 0.0
      %vm640 = vcmask 1042432
      %v641 = vrot.slane %v636, 5
      %v642 = vrot.slane %v637, 5
      %v643 = vsel %vm640, %v641, %v642
      %v646 = vsel %vm640, 0.0, %v641
      %v647 = vsel %vm640, %v642, 0.0
      %v648 = vld [vmem:[%s2] sm:$0xf]
      %s649 = scalar_lea.vmem %s2, 4
      %v650 = vld [vmem:[%s649] sm:$0xf]
      %vm653 = vcmask 1046528
      %v654 = vrot.slane %v646, 1
      %v655 = vrot.slane %v643, 1
      %v656 = vsel %vm653, %v654, %v655
      %v657 = vrot.slane %v647, 1
      %v658 = vsel %vm653, %v655, %v657
      %vm659 = vcmask 31744
      %v660 = vsel %vm659, %v656, 0
      %v662 = vsel %vm659, %v658, 0
      %vm664 = vcmask 1043456
      %v666 = vsel %vm664, %v650, 0
      %668 = vmatprep.subr.mxu0 0.0
      %669 = vmatpush1.msra.mxu0 0.0
      %670 = vmatprep.subr.mxu0 0.0
      %671 = vmatpush1.msra.mxu0 0.0
      %672 = vmatprep.subr.mxu0 0.0
      %673 = vmatpush1.msra.mxu0 0.0
      %674 = vmatprep.subr.mxu0 0.0
      %675 = vmatpush1.msra.mxu0 0.0
      %676 = vmatprep.subr.mxu0 0.0
      %677 = vmatpush1.msra.mxu0 0.0
      %678 = vmatprep.subr.mxu0 0.0
      %679 = vmatpush1.msra.mxu0 0.0
      %680 = vmatprep.subr.mxu0 0.0
      %681 = vmatpush1.msra.mxu0 0.0
      %682 = vmatprep.subr.mxu0 0.0
      %683 = vmatpush1.msra.mxu0 0.0
      %684 = vmatprep.subr.mxu0 0.0
      %685 = vmatpush1.msra.mxu0 0.0
      %686 = vmatprep.subr.mxu0 0.0
      %687 = vmatpush1.msra.mxu0 0.0
      %688 = vmatprep.subr.mxu0 0.0
      %689 = vmatpush1.msra.mxu0 0.0
      %690 = vmatprep.subr.mxu0 0.0
      %691 = vmatpush1.msra.mxu0 0.0
      %692 = vmatprep.subr.mxu0 0.0
      %693 = vmatpush1.msra.mxu0 0.0
      %694 = vmatprep.subr.mxu0 0.0
      %695 = vmatpush1.msra.mxu0 0.0
      %696 = vmatprep.subr.mxu0 0.0
      %697 = vmatpush1.msra.mxu0 0.0
      %698 = vmatprep.subr.mxu0 0.0
      %699 = vmatpush1.msra.mxu0 %v666
      %700 = vmatprep.subr.mxu0 0.0
      %701 = vmatpush2.msra.mxu0 0.0
      %702 = vmatprep.subr.mxu0 0.0
      %703 = vmatpush2.msra.mxu0 0.0
      %704 = vmatprep.subr.mxu0 0.0
      %705 = vmatpush2.msra.mxu0 0.0
      %706 = vmatprep.subr.mxu0 0.0
      %707 = vmatpush2.msra.mxu0 0.0
      %708 = vmatprep.subr.mxu0 0.0
      %709 = vmatpush2.msra.mxu0 0.0
      %710 = vmatprep.subr.mxu0 0.0
      %711 = vmatpush2.msra.mxu0 0.0
      %712 = vmatprep.subr.mxu0 0.0
      %713 = vmatpush2.msra.mxu0 0.0
      %714 = vmatprep.subr.mxu0 0.0
      %715 = vmatpush2.msra.mxu0 0.0
      %716 = vmatprep.subr.mxu0 0.0
      %717 = vmatpush2.msra.mxu0 0.0
      %718 = vmatprep.subr.mxu0 0.0
      %719 = vmatpush2.msra.mxu0 0.0
      %720 = vmatprep.subr.mxu0 0.0
      %721 = vmatpush2.msra.mxu0 0.0
      %722 = vmatprep.subr.mxu0 0.0
      %723 = vmatpush2.msra.mxu0 0.0
      %724 = vmatprep.subr.mxu0 0.0
      %725 = vmatpush2.msra.mxu0 0.0
      %726 = vmatprep.subr.mxu0 0.0
      %727 = vmatpush2.msra.mxu0 0.0
      %728 = vmatprep.subr.mxu0 0.0
      %729 = vmatpush2.msra.mxu0 0.0
      %730 = vmatprep.subr.mxu0 0.0
      %731 = vmatpush2.msra.mxu0 0.0
      %732 = vmatprep.mubr.f32.mxu0 0.0
      %733 = vmatmul.mubr.f32.gmra.mxu0 %v660
      %v734 = vpop.f32.mrf.mxu0
      %v735 = vadd.f32 0.0, %v734
      %v736 = vpop.f32.mrf.mxu0
      %737 = vmatprep.mubr.f32.mxu0 0.0
      %738 = vmatmul.mubr.f32.gmra.mxu0 %v662
      %v739 = vpop.f32.mrf.mxu0
      %v740 = vadd.f32 0.0, %v739
      %v741 = vpop.f32.mrf.mxu0
      %742 = vdwg.mxu0
      %v743 = vsel %vm659, %v646, 0
      %v745 = vsel %vm659, %v643, 0
      %v748 = vsel %vm664, %v648, 0
      %750 = vmatprep.subr.mxu0 0.0
      %751 = vmatpush1.msra.mxu0 0.0
      %752 = vmatprep.subr.mxu0 0.0
      %753 = vmatpush1.msra.mxu0 0.0
      %754 = vmatprep.subr.mxu0 0.0
      %755 = vmatpush1.msra.mxu0 0.0
      %756 = vmatprep.subr.mxu0 0.0
      %757 = vmatpush1.msra.mxu0 0.0
      %758 = vmatprep.subr.mxu0 0.0
      %759 = vmatpush1.msra.mxu0 0.0
      %760 = vmatprep.subr.mxu0 0.0
      %761 = vmatpush1.msra.mxu0 0.0
      %762 = vmatprep.subr.mxu0 0.0
      %763 = vmatpush1.msra.mxu0 0.0
      %764 = vmatprep.subr.mxu0 0.0
      %765 = vmatpush1.msra.mxu0 0.0
      %766 = vmatprep.subr.mxu0 0.0
      %767 = vmatpush1.msra.mxu0 0.0
      %768 = vmatprep.subr.mxu0 0.0
      %769 = vmatpush1.msra.mxu0 0.0
      %770 = vmatprep.subr.mxu0 0.0
      %771 = vmatpush1.msra.mxu0 0.0
      %772 = vmatprep.subr.mxu0 0.0
      %773 = vmatpush1.msra.mxu0 0.0
      %774 = vmatprep.subr.mxu0 0.0
      %775 = vmatpush1.msra.mxu0 0.0
      %776 = vmatprep.subr.mxu0 0.0
      %777 = vmatpush1.msra.mxu0 0.0
      %778 = vmatprep.subr.mxu0 0.0
      %779 = vmatpush1.msra.mxu0 0.0
      %780 = vmatprep.subr.mxu0 0.0
      %781 = vmatpush1.msra.mxu0 %v748
      %782 = vmatprep.subr.mxu0 0.0
      %783 = vmatpush2.msra.mxu0 0.0
      %784 = vmatprep.subr.mxu0 0.0
      %785 = vmatpush2.msra.mxu0 0.0
      %786 = vmatprep.subr.mxu0 0.0
      %787 = vmatpush2.msra.mxu0 0.0
      %788 = vmatprep.subr.mxu0 0.0
      %789 = vmatpush2.msra.mxu0 0.0
      %790 = vmatprep.subr.mxu0 0.0
      %791 = vmatpush2.msra.mxu0 0.0
      %792 = vmatprep.subr.mxu0 0.0
      %793 = vmatpush2.msra.mxu0 0.0
      %794 = vmatprep.subr.mxu0 0.0
      %795 = vmatpush2.msra.mxu0 0.0
      %796 = vmatprep.subr.mxu0 0.0
      %797 = vmatpush2.msra.mxu0 0.0
      %798 = vmatprep.subr.mxu0 0.0
      %799 = vmatpush2.msra.mxu0 0.0
      %800 = vmatprep.subr.mxu0 0.0
      %801 = vmatpush2.msra.mxu0 0.0
      %802 = vmatprep.subr.mxu0 0.0
      %803 = vmatpush2.msra.mxu0 0.0
      %804 = vmatprep.subr.mxu0 0.0
      %805 = vmatpush2.msra.mxu0 0.0
      %806 = vmatprep.subr.mxu0 0.0
      %807 = vmatpush2.msra.mxu0 0.0
      %808 = vmatprep.subr.mxu0 0.0
      %809 = vmatpush2.msra.mxu0 0.0
      %810 = vmatprep.subr.mxu0 0.0
      %811 = vmatpush2.msra.mxu0 0.0
      %812 = vmatprep.subr.mxu0 0.0
      %813 = vmatpush2.msra.mxu0 0.0
      %814 = vmatprep.mubr.f32.mxu0 0.0
      %815 = vmatmul.mubr.f32.gmra.mxu0 %v743
      %v816 = vpop.f32.mrf.mxu0
      %v817 = vadd.f32 %v735, %v816
      %v818 = vpop.f32.mrf.mxu0
      %819 = vmatprep.mubr.f32.mxu0 0.0
      %820 = vmatmul.mubr.f32.gmra.mxu0 %v745
      %v821 = vpop.f32.mrf.mxu0
      %v822 = vadd.f32 %v740, %v821
      %v823 = vpop.f32.mrf.mxu0
      %824 = vdwg.mxu0
      %s825 = scalar_lea.vmem %s2, 8
      %v826 = vld [vmem:[%s825] sm:$0xf]
      %vm827 = vcmask 1045504
      %v828 = vrot.slane %v646, 2
      %v829 = vrot.slane %v643, 2
      %v830 = vsel %vm827, %v828, %v829
      %v831 = vrot.slane %v647, 2
      %v832 = vsel %vm827, %v829, %v831
      %v833 = vsel %vm659, %v830, 0
      %v835 = vsel %vm659, %v832, 0
      %v838 = vsel %vm664, %v826, 0
      %840 = vmatprep.subr.mxu0 0.0
      %841 = vmatpush1.msra.mxu0 0.0
      %842 = vmatprep.subr.mxu0 0.0
      %843 = vmatpush1.msra.mxu0 0.0
      %844 = vmatprep.subr.mxu0 0.0
      %845 = vmatpush1.msra.mxu0 0.0
      %846 = vmatprep.subr.mxu0 0.0
      %847 = vmatpush1.msra.mxu0 0.0
      %848 = vmatprep.subr.mxu0 0.0
      %849 = vmatpush1.msra.mxu0 0.0
      %850 = vmatprep.subr.mxu0 0.0
      %851 = vmatpush1.msra.mxu0 0.0
      %852 = vmatprep.subr.mxu0 0.0
      %853 = vmatpush1.msra.mxu0 0.0
      %854 = vmatprep.subr.mxu0 0.0
      %855 = vmatpush1.msra.mxu0 0.0
      %856 = vmatprep.subr.mxu0 0.0
      %857 = vmatpush1.msra.mxu0 0.0
      %858 = vmatprep.subr.mxu0 0.0
      %859 = vmatpush1.msra.mxu0 0.0
      %860 = vmatprep.subr.mxu0 0.0
      %861 = vmatpush1.msra.mxu0 0.0
      %862 = vmatprep.subr.mxu0 0.0
      %863 = vmatpush1.msra.mxu0 0.0
      %864 = vmatprep.subr.mxu0 0.0
      %865 = vmatpush1.msra.mxu0 0.0
      %866 = vmatprep.subr.mxu0 0.0
      %867 = vmatpush1.msra.mxu0 0.0
      %868 = vmatprep.subr.mxu0 0.0
      %869 = vmatpush1.msra.mxu0 0.0
      %870 = vmatprep.subr.mxu0 0.0
      %871 = vmatpush1.msra.mxu0 %v838
      %872 = vmatprep.subr.mxu0 0.0
      %873 = vmatpush2.msra.mxu0 0.0
      %874 = vmatprep.subr.mxu0 0.0
      %875 = vmatpush2.msra.mxu0 0.0
      %876 = vmatprep.subr.mxu0 0.0
      %877 = vmatpush2.msra.mxu0 0.0
      %878 = vmatprep.subr.mxu0 0.0
      %879 = vmatpush2.msra.mxu0 0.0
      %880 = vmatprep.subr.mxu0 0.0
      %881 = vmatpush2.msra.mxu0 0.0
      %882 = vmatprep.subr.mxu0 0.0
      %883 = vmatpush2.msra.mxu0 0.0
      %884 = vmatprep.subr.mxu0 0.0
      %885 = vmatpush2.msra.mxu0 0.0
      %886 = vmatprep.subr.mxu0 0.0
      %887 = vmatpush2.msra.mxu0 0.0
      %888 = vmatprep.subr.mxu0 0.0
      %889 = vmatpush2.msra.mxu0 0.0
      %890 = vmatprep.subr.mxu0 0.0
      %891 = vmatpush2.msra.mxu0 0.0
      %892 = vmatprep.subr.mxu0 0.0
      %893 = vmatpush2.msra.mxu0 0.0
      %894 = vmatprep.subr.mxu0 0.0
      %895 = vmatpush2.msra.mxu0 0.0
      %896 = vmatprep.subr.mxu0 0.0
      %897 = vmatpush2.msra.mxu0 0.0
      %898 = vmatprep.subr.mxu0 0.0
      %899 = vmatpush2.msra.mxu0 0.0
      %900 = vmatprep.subr.mxu0 0.0
      %901 = vmatpush2.msra.mxu0 0.0
      %902 = vmatprep.subr.mxu0 0.0
      %903 = vmatpush2.msra.mxu0 0.0
      %904 = vmatprep.mubr.f32.mxu0 0.0
      %905 = vmatmul.mubr.f32.gmra.mxu0 %v833
      %v906 = vpop.f32.mrf.mxu0
      %v907 = vadd.f32 0.0, %v906
      %v908 = vpop.f32.mrf.mxu0
      %909 = vmatprep.mubr.f32.mxu0 0.0
      %910 = vmatmul.mubr.f32.gmra.mxu0 %v835
      %v911 = vpop.f32.mrf.mxu0
      %v912 = vadd.f32 0.0, %v911
      %v913 = vpop.f32.mrf.mxu0
      %914 = vdwg.mxu0
      %v915 = vadd.f32 %v817, %v907
      %v916 = vadd.f32 %v822, %v912
      %s917 = scalar_lea.vmem %s2, 12
      %v918 = vld [vmem:[%s917] sm:$0xf]
      %vm919 = vcmask 1044480
      %v920 = vrot.slane %v646, 3
      %v921 = vrot.slane %v643, 3
      %v922 = vsel %vm919, %v920, %v921
      %v923 = vrot.slane %v647, 3
      %v924 = vsel %vm919, %v921, %v923
      %v925 = vsel %vm659, %v922, 0
      %v927 = vsel %vm659, %v924, 0
      %v930 = vsel %vm664, %v918, 0
      %932 = vmatprep.subr.mxu0 0.0
      %933 = vmatpush1.msra.mxu0 0.0
      %934 = vmatprep.subr.mxu0 0.0
      %935 = vmatpush1.msra.mxu0 0.0
      %936 = vmatprep.subr.mxu0 0.0
      %937 = vmatpush1.msra.mxu0 0.0
      %938 = vmatprep.subr.mxu0 0.0
      %939 = vmatpush1.msra.mxu0 0.0
      %940 = vmatprep.subr.mxu0 0.0
      %941 = vmatpush1.msra.mxu0 0.0
      %942 = vmatprep.subr.mxu0 0.0
      %943 = vmatpush1.msra.mxu0 0.0
      %944 = vmatprep.subr.mxu0 0.0
      %945 = vmatpush1.msra.mxu0 0.0
      %946 = vmatprep.subr.mxu0 0.0
      %947 = vmatpush1.msra.mxu0 0.0
      %948 = vmatprep.subr.mxu0 0.0
      %949 = vmatpush1.msra.mxu0 0.0
      %950 = vmatprep.subr.mxu0 0.0
      %951 = vmatpush1.msra.mxu0 0.0
      %952 = vmatprep.subr.mxu0 0.0
      %953 = vmatpush1.msra.mxu0 0.0
      %954 = vmatprep.subr.mxu0 0.0
      %955 = vmatpush1.msra.mxu0 0.0
      %956 = vmatprep.subr.mxu0 0.0
      %957 = vmatpush1.msra.mxu0 0.0
      %958 = vmatprep.subr.mxu0 0.0
      %959 = vmatpush1.msra.mxu0 0.0
      %960 = vmatprep.subr.mxu0 0.0
      %961 = vmatpush1.msra.mxu0 0.0
      %962 = vmatprep.subr.mxu0 0.0
      %963 = vmatpush1.msra.mxu0 %v930
      %964 = vmatprep.subr.mxu0 0.0
      %965 = vmatpush2.msra.mxu0 0.0
      %966 = vmatprep.subr.mxu0 0.0
      %967 = vmatpush2.msra.mxu0 0.0
      %968 = vmatprep.subr.mxu0 0.0
      %969 = vmatpush2.msra.mxu0 0.0
      %970 = vmatprep.subr.mxu0 0.0
      %971 = vmatpush2.msra.mxu0 0.0
      %972 = vmatprep.subr.mxu0 0.0
      %973 = vmatpush2.msra.mxu0 0.0
      %974 = vmatprep.subr.mxu0 0.0
      %975 = vmatpush2.msra.mxu0 0.0
      %976 = vmatprep.subr.mxu0 0.0
      %977 = vmatpush2.msra.mxu0 0.0
      %978 = vmatprep.subr.mxu0 0.0
      %979 = vmatpush2.msra.mxu0 0.0
      %980 = vmatprep.subr.mxu0 0.0
      %981 = vmatpush2.msra.mxu0 0.0
      %982 = vmatprep.subr.mxu0 0.0
      %983 = vmatpush2.msra.mxu0 0.0
      %984 = vmatprep.subr.mxu0 0.0
      %985 = vmatpush2.msra.mxu0 0.0
      %986 = vmatprep.subr.mxu0 0.0
      %987 = vmatpush2.msra.mxu0 0.0
      %988 = vmatprep.subr.mxu0 0.0
      %989 = vmatpush2.msra.mxu0 0.0
      %990 = vmatprep.subr.mxu0 0.0
      %991 = vmatpush2.msra.mxu0 0.0
      %992 = vmatprep.subr.mxu0 0.0
      %993 = vmatpush2.msra.mxu0 0.0
      %994 = vmatprep.subr.mxu0 0.0
      %995 = vmatpush2.msra.mxu0 0.0
      %996 = vmatprep.mubr.f32.mxu0 0.0
      %997 = vmatmul.mubr.f32.gmra.mxu0 %v925
      %v998 = vpop.f32.mrf.mxu0
      %v999 = vadd.f32 0.0, %v998
      %v1000 = vpop.f32.mrf.mxu0
      %1001 = vmatprep.mubr.f32.mxu0 0.0
      %1002 = vmatmul.mubr.f32.gmra.mxu0 %v927
      %v1003 = vpop.f32.mrf.mxu0
      %v1004 = vadd.f32 0.0, %v1003
      %v1005 = vpop.f32.mrf.mxu0
      %1006 = vdwg.mxu0
      %v1007 = vadd.f32 %v915, %v999
      %v1008 = vadd.f32 %v916, %v1004
      %s1009 = scalar_lea.vmem %s2, 16
      %v1010 = vld [vmem:[%s1009] sm:$0xf]
      %v1011 = vrot.slane %v646, 4
      %v1012 = vrot.slane %v643, 4
      %v1013 = vsel %vm664, %v1011, %v1012
      %v1014 = vrot.slane %v647, 4
      %v1015 = vsel %vm664, %v1012, %v1014
      %v1016 = vsel %vm659, %v1013, 0
      %v1018 = vsel %vm659, %v1015, 0
      %v1021 = vsel %vm664, %v1010, 0
      %1023 = vmatprep.subr.mxu0 0.0
      %1024 = vmatpush1.msra.mxu0 0.0
      %1025 = vmatprep.subr.mxu0 0.0
      %1026 = vmatpush1.msra.mxu0 0.0
      %1027 = vmatprep.subr.mxu0 0.0
      %1028 = vmatpush1.msra.mxu0 0.0
      %1029 = vmatprep.subr.mxu0 0.0
      %1030 = vmatpush1.msra.mxu0 0.0
      %1031 = vmatprep.subr.mxu0 0.0
      %1032 = vmatpush1.msra.mxu0 0.0
      %1033 = vmatprep.subr.mxu0 0.0
      %1034 = vmatpush1.msra.mxu0 0.0
      %1035 = vmatprep.subr.mxu0 0.0
      %1036 = vmatpush1.msra.mxu0 0.0
      %1037 = vmatprep.subr.mxu0 0.0
      %1038 = vmatpush1.msra.mxu0 0.0
      %1039 = vmatprep.subr.mxu0 0.0
      %1040 = vmatpush1.msra.mxu0 0.0
      %1041 = vmatprep.subr.mxu0 0.0
      %1042 = vmatpush1.msra.mxu0 0.0
      %1043 = vmatprep.subr.mxu0 0.0
      %1044 = vmatpush1.msra.mxu0 0.0
      %1045 = vmatprep.subr.mxu0 0.0
      %1046 = vmatpush1.msra.mxu0 0.0
      %1047 = vmatprep.subr.mxu0 0.0
      %1048 = vmatpush1.msra.mxu0 0.0
      %1049 = vmatprep.subr.mxu0 0.0
      %1050 = vmatpush1.msra.mxu0 0.0
      %1051 = vmatprep.subr.mxu0 0.0
      %1052 = vmatpush1.msra.mxu0 0.0
      %1053 = vmatprep.subr.mxu0 0.0
      %1054 = vmatpush1.msra.mxu0 %v1021
      %1055 = vmatprep.subr.mxu0 0.0
      %1056 = vmatpush2.msra.mxu0 0.0
      %1057 = vmatprep.subr.mxu0 0.0
      %1058 = vmatpush2.msra.mxu0 0.0
      %1059 = vmatprep.subr.mxu0 0.0
      %1060 = vmatpush2.msra.mxu0 0.0
      %1061 = vmatprep.subr.mxu0 0.0
      %1062 = vmatpush2.msra.mxu0 0.0
      %1063 = vmatprep.subr.mxu0 0.0
      %1064 = vmatpush2.msra.mxu0 0.0
      %1065 = vmatprep.subr.mxu0 0.0
      %1066 = vmatpush2.msra.mxu0 0.0
      %1067 = vmatprep.subr.mxu0 0.0
      %1068 = vmatpush2.msra.mxu0 0.0
      %1069 = vmatprep.subr.mxu0 0.0
      %1070 = vmatpush2.msra.mxu0 0.0
      %1071 = vmatprep.subr.mxu0 0.0
      %1072 = vmatpush2.msra.mxu0 0.0
      %1073 = vmatprep.subr.mxu0 0.0
      %1074 = vmatpush2.msra.mxu0 0.0
      %1075 = vmatprep.subr.mxu0 0.0
      %1076 = vmatpush2.msra.mxu0 0.0
      %1077 = vmatprep.subr.mxu0 0.0
      %1078 = vmatpush2.msra.mxu0 0.0
      %1079 = vmatprep.subr.mxu0 0.0
      %1080 = vmatpush2.msra.mxu0 0.0
      %1081 = vmatprep.subr.mxu0 0.0
      %1082 = vmatpush2.msra.mxu0 0.0
      %1083 = vmatprep.subr.mxu0 0.0
      %1084 = vmatpush2.msra.mxu0 0.0
      %1085 = vmatprep.subr.mxu0 0.0
      %1086 = vmatpush2.msra.mxu0 0.0
      %1087 = vmatprep.mubr.f32.mxu0 0.0
      %1088 = vmatmul.mubr.f32.gmra.mxu0 %v1016
      %v1089 = vpop.f32.mrf.mxu0
      %v1090 = vadd.f32 0.0, %v1089
      %v1091 = vpop.f32.mrf.mxu0
      %1092 = vmatprep.mubr.f32.mxu0 0.0
      %1093 = vmatmul.mubr.f32.gmra.mxu0 %v1018
      %v1094 = vpop.f32.mrf.mxu0
      %v1095 = vadd.f32 0.0, %v1094
      %v1096 = vpop.f32.mrf.mxu0
      %1097 = vdwg.mxu0
      %v1098 = vadd.f32 %v1007, %v1090
      %v1099 = vadd.f32 %v1008, %v1095
      %s1100 = scalar_lea.vmem %s2, 20
      %v1101 = vld [vmem:[%s1100] sm:$0xf]
      %v1102 = vrot.slane %v646, 5
      %v1103 = vrot.slane %v643, 5
      %v1104 = vsel %vm640, %v1102, %v1103
      %v1105 = vrot.slane %v647, 5
      %v1106 = vsel %vm640, %v1103, %v1105
      %v1107 = vsel %vm659, %v1104, 0
      %v1109 = vsel %vm659, %v1106, 0
      %v1112 = vsel %vm664, %v1101, 0
      %1114 = vmatprep.subr.mxu0 0.0
      %1115 = vmatpush1.msra.mxu0 0.0
      %1116 = vmatprep.subr.mxu0 0.0
      %1117 = vmatpush1.msra.mxu0 0.0
      %1118 = vmatprep.subr.mxu0 0.0
      %1119 = vmatpush1.msra.mxu0 0.0
      %1120 = vmatprep.subr.mxu0 0.0
      %1121 = vmatpush1.msra.mxu0 0.0
      %1122 = vmatprep.subr.mxu0 0.0
      %1123 = vmatpush1.msra.mxu0 0.0
      %1124 = vmatprep.subr.mxu0 0.0
      %1125 = vmatpush1.msra.mxu0 0.0
      %1126 = vmatprep.subr.mxu0 0.0
      %1127 = vmatpush1.msra.mxu0 0.0
      %1128 = vmatprep.subr.mxu0 0.0
      %1129 = vmatpush1.msra.mxu0 0.0
      %1130 = vmatprep.subr.mxu0 0.0
      %1131 = vmatpush1.msra.mxu0 0.0
      %1132 = vmatprep.subr.mxu0 0.0
      %1133 = vmatpush1.msra.mxu0 0.0
      %1134 = vmatprep.subr.mxu0 0.0
      %1135 = vmatpush1.msra.mxu0 0.0
      %1136 = vmatprep.subr.mxu0 0.0
      %1137 = vmatpush1.msra.mxu0 0.0
      %1138 = vmatprep.subr.mxu0 0.0
      %1139 = vmatpush1.msra.mxu0 0.0
      %1140 = vmatprep.subr.mxu0 0.0
      %1141 = vmatpush1.msra.mxu0 0.0
      %1142 = vmatprep.subr.mxu0 0.0
      %1143 = vmatpush1.msra.mxu0 0.0
      %1144 = vmatprep.subr.mxu0 0.0
      %1145 = vmatpush1.msra.mxu0 %v1112
      %1146 = vmatprep.subr.mxu0 0.0
      %1147 = vmatpush2.msra.mxu0 0.0
      %1148 = vmatprep.subr.mxu0 0.0
      %1149 = vmatpush2.msra.mxu0 0.0
      %1150 = vmatprep.subr.mxu0 0.0
      %1151 = vmatpush2.msra.mxu0 0.0
      %1152 = vmatprep.subr.mxu0 0.0
      %1153 = vmatpush2.msra.mxu0 0.0
      %1154 = vmatprep.subr.mxu0 0.0
      %1155 = vmatpush2.msra.mxu0 0.0
      %1156 = vmatprep.subr.mxu0 0.0
      %1157 = vmatpush2.msra.mxu0 0.0
      %1158 = vmatprep.subr.mxu0 0.0
      %1159 = vmatpush2.msra.mxu0 0.0
      %1160 = vmatprep.subr.mxu0 0.0
      %1161 = vmatpush2.msra.mxu0 0.0
      %1162 = vmatprep.subr.mxu0 0.0
      %1163 = vmatpush2.msra.mxu0 0.0
      %1164 = vmatprep.subr.mxu0 0.0
      %1165 = vmatpush2.msra.mxu0 0.0
      %1166 = vmatprep.subr.mxu0 0.0
      %1167 = vmatpush2.msra.mxu0 0.0
      %1168 = vmatprep.subr.mxu0 0.0
      %1169 = vmatpush2.msra.mxu0 0.0
      %1170 = vmatprep.subr.mxu0 0.0
      %1171 = vmatpush2.msra.mxu0 0.0
      %1172 = vmatprep.subr.mxu0 0.0
      %1173 = vmatpush2.msra.mxu0 0.0
      %1174 = vmatprep.subr.mxu0 0.0
      %1175 = vmatpush2.msra.mxu0 0.0
      %1176 = vmatprep.subr.mxu0 0.0
      %1177 = vmatpush2.msra.mxu0 0.0
      %1178 = vmatprep.mubr.f32.mxu0 0.0
      %1179 = vmatmul.mubr.f32.gmra.mxu0 %v1107
      %v1180 = vpop.f32.mrf.mxu0
      %v1181 = vadd.f32 0.0, %v1180
      %v1182 = vpop.f32.mrf.mxu0
      %1183 = vmatprep.mubr.f32.mxu0 0.0
      %1184 = vmatmul.mubr.f32.gmra.mxu0 %v1109
      %v1185 = vpop.f32.mrf.mxu0
      %v1186 = vadd.f32 0.0, %v1185
      %v1187 = vpop.f32.mrf.mxu0
      %1188 = vdwg.mxu0
      %v1189 = vadd.f32 %v1098, %v1181
      %v1190 = vadd.f32 %v1099, %v1186
      %s1191 = scalar_lea.vmem %s2, 24
      %v1192 = vld [vmem:[%s1191] sm:$0xf]
      %vm1193 = vcmask 1041408
      %v1194 = vrot.slane %v646, 6
      %v1195 = vrot.slane %v643, 6
      %v1196 = vsel %vm1193, %v1194, %v1195
      %v1197 = vrot.slane %v647, 6
      %v1198 = vsel %vm1193, %v1195, %v1197
      %v1199 = vsel %vm659, %v1196, 0
      %v1201 = vsel %vm659, %v1198, 0
      %v1204 = vsel %vm664, %v1192, 0
      %1206 = vmatprep.subr.mxu0 0.0
      %1207 = vmatpush1.msra.mxu0 0.0
      %1208 = vmatprep.subr.mxu0 0.0
      %1209 = vmatpush1.msra.mxu0 0.0
      %1210 = vmatprep.subr.mxu0 0.0
      %1211 = vmatpush1.msra.mxu0 0.0
      %1212 = vmatprep.subr.mxu0 0.0
      %1213 = vmatpush1.msra.mxu0 0.0
      %1214 = vmatprep.subr.mxu0 0.0
      %1215 = vmatpush1.msra.mxu0 0.0
      %1216 = vmatprep.subr.mxu0 0.0
      %1217 = vmatpush1.msra.mxu0 0.0
      %1218 = vmatprep.subr.mxu0 0.0
      %1219 = vmatpush1.msra.mxu0 0.0
      %1220 = vmatprep.subr.mxu0 0.0
      %1221 = vmatpush1.msra.mxu0 0.0
      %1222 = vmatprep.subr.mxu0 0.0
      %1223 = vmatpush1.msra.mxu0 0.0
      %1224 = vmatprep.subr.mxu0 0.0
      %1225 = vmatpush1.msra.mxu0 0.0
      %1226 = vmatprep.subr.mxu0 0.0
      %1227 = vmatpush1.msra.mxu0 0.0
      %1228 = vmatprep.subr.mxu0 0.0
      %1229 = vmatpush1.msra.mxu0 0.0
      %1230 = vmatprep.subr.mxu0 0.0
      %1231 = vmatpush1.msra.mxu0 0.0
      %1232 = vmatprep.subr.mxu0 0.0
      %1233 = vmatpush1.msra.mxu0 0.0
      %1234 = vmatprep.subr.mxu0 0.0
      %1235 = vmatpush1.msra.mxu0 0.0
      %1236 = vmatprep.subr.mxu0 0.0
      %1237 = vmatpush1.msra.mxu0 %v1204
      %1238 = vmatprep.subr.mxu0 0.0
      %1239 = vmatpush2.msra.mxu0 0.0
      %1240 = vmatprep.subr.mxu0 0.0
      %1241 = vmatpush2.msra.mxu0 0.0
      %1242 = vmatprep.subr.mxu0 0.0
      %1243 = vmatpush2.msra.mxu0 0.0
      %1244 = vmatprep.subr.mxu0 0.0
      %1245 = vmatpush2.msra.mxu0 0.0
      %1246 = vmatprep.subr.mxu0 0.0
      %1247 = vmatpush2.msra.mxu0 0.0
      %1248 = vmatprep.subr.mxu0 0.0
      %1249 = vmatpush2.msra.mxu0 0.0
      %1250 = vmatprep.subr.mxu0 0.0
      %1251 = vmatpush2.msra.mxu0 0.0
      %1252 = vmatprep.subr.mxu0 0.0
      %1253 = vmatpush2.msra.mxu0 0.0
      %1254 = vmatprep.subr.mxu0 0.0
      %1255 = vmatpush2.msra.mxu0 0.0
      %1256 = vmatprep.subr.mxu0 0.0
      %1257 = vmatpush2.msra.mxu0 0.0
      %1258 = vmatprep.subr.mxu0 0.0
      %1259 = vmatpush2.msra.mxu0 0.0
      %1260 = vmatprep.subr.mxu0 0.0
      %1261 = vmatpush2.msra.mxu0 0.0
      %1262 = vmatprep.subr.mxu0 0.0
      %1263 = vmatpush2.msra.mxu0 0.0
      %1264 = vmatprep.subr.mxu0 0.0
      %1265 = vmatpush2.msra.mxu0 0.0
      %1266 = vmatprep.subr.mxu0 0.0
      %1267 = vmatpush2.msra.mxu0 0.0
      %1268 = vmatprep.subr.mxu0 0.0
      %1269 = vmatpush2.msra.mxu0 0.0
      %1270 = vmatprep.mubr.f32.mxu0 0.0
      %1271 = vmatmul.mubr.f32.gmra.mxu0 %v1199
      %v1272 = vpop.f32.mrf.mxu0
      %v1273 = vadd.f32 0.0, %v1272
      %v1274 = vpop.f32.mrf.mxu0
      %1275 = vmatprep.mubr.f32.mxu0 0.0
      %1276 = vmatmul.mubr.f32.gmra.mxu0 %v1201
      %v1277 = vpop.f32.mrf.mxu0
      %v1278 = vadd.f32 0.0, %v1277
      %v1279 = vpop.f32.mrf.mxu0
      %1280 = vdwg.mxu0
      %v1281 = vadd.f32 %v1189, %v1273
      %v1282 = vadd.f32 %v1190, %v1278
      %v1283 = vld [vmem:[%s3] sm:$0x1]
      %v1285 = vlaneseq
      %v1286 = vshrl.u32 %v1285, 7
      %v1287 = vsub.s32 0, %v1286
      %v1288 = vrot.slane %v1283, %v1287
      %v1290 = vadd.f32 %v1281, %v1288
      %v1291 = vadd.f32 %v1282, %v1288
      %v1292 = vmax.f32 %v1290, 0.0
      %v1293 = vmax.f32 %v1291, 0.0
      %v1294 = vld [vmem:[%s4] sm:$0xff]
      %v1295 = vld [vmem:[%s4 + $0x8] sm:$0xf]
      %vm1296 = vcmask 97280
      %v1298 = vsel %vm1296, %v1292, 0
      %v1301 = vsel %vm1296, %v1293, 0
      %v1304 = vsel %vm664, %v1295, 0
      %1306 = vmatprep.subr.mxu0 0.0
      %1307 = vmatpush1.msra.mxu0 0.0
      %1308 = vmatprep.subr.mxu0 0.0
      %1309 = vmatpush1.msra.mxu0 0.0
      %1310 = vmatprep.subr.mxu0 0.0
      %1311 = vmatpush1.msra.mxu0 0.0
      %1312 = vmatprep.subr.mxu0 0.0
      %1313 = vmatpush1.msra.mxu0 0.0
      %1314 = vmatprep.subr.mxu0 0.0
      %1315 = vmatpush1.msra.mxu0 0.0
      %1316 = vmatprep.subr.mxu0 0.0
      %1317 = vmatpush1.msra.mxu0 0.0
      %1318 = vmatprep.subr.mxu0 0.0
      %1319 = vmatpush1.msra.mxu0 0.0
      %1320 = vmatprep.subr.mxu0 0.0
      %1321 = vmatpush1.msra.mxu0 0.0
      %1322 = vmatprep.subr.mxu0 0.0
      %1323 = vmatpush1.msra.mxu0 0.0
      %1324 = vmatprep.subr.mxu0 0.0
      %1325 = vmatpush1.msra.mxu0 0.0
      %1326 = vmatprep.subr.mxu0 0.0
      %1327 = vmatpush1.msra.mxu0 0.0
      %1328 = vmatprep.subr.mxu0 0.0
      %1329 = vmatpush1.msra.mxu0 0.0
      %1330 = vmatprep.subr.mxu0 0.0
      %1331 = vmatpush1.msra.mxu0 0.0
      %1332 = vmatprep.subr.mxu0 0.0
      %1333 = vmatpush1.msra.mxu0 0.0
      %1334 = vmatprep.subr.mxu0 0.0
      %1335 = vmatpush1.msra.mxu0 %v1304
      %1336 = vmatprep.subr.mxu0 0.0
      %1337 = vmatpush1.msra.mxu0 %v1294
      %1338 = vmatprep.subr.mxu0 0.0
      %1339 = vmatpush2.msra.mxu0 0.0
      %1340 = vmatprep.subr.mxu0 0.0
      %1341 = vmatpush2.msra.mxu0 0.0
      %1342 = vmatprep.subr.mxu0 0.0
      %1343 = vmatpush2.msra.mxu0 0.0
      %1344 = vmatprep.subr.mxu0 0.0
      %1345 = vmatpush2.msra.mxu0 0.0
      %1346 = vmatprep.subr.mxu0 0.0
      %1347 = vmatpush2.msra.mxu0 0.0
      %1348 = vmatprep.subr.mxu0 0.0
      %1349 = vmatpush2.msra.mxu0 0.0
      %1350 = vmatprep.subr.mxu0 0.0
      %1351 = vmatpush2.msra.mxu0 0.0
      %1352 = vmatprep.subr.mxu0 0.0
      %1353 = vmatpush2.msra.mxu0 0.0
      %1354 = vmatprep.subr.mxu0 0.0
      %1355 = vmatpush2.msra.mxu0 0.0
      %1356 = vmatprep.subr.mxu0 0.0
      %1357 = vmatpush2.msra.mxu0 0.0
      %1358 = vmatprep.subr.mxu0 0.0
      %1359 = vmatpush2.msra.mxu0 0.0
      %1360 = vmatprep.subr.mxu0 0.0
      %1361 = vmatpush2.msra.mxu0 0.0
      %1362 = vmatprep.subr.mxu0 0.0
      %1363 = vmatpush2.msra.mxu0 0.0
      %1364 = vmatprep.subr.mxu0 0.0
      %1365 = vmatpush2.msra.mxu0 0.0
      %1366 = vmatprep.subr.mxu0 0.0
      %1367 = vmatpush2.msra.mxu0 0.0
      %1368 = vmatprep.subr.mxu0 0.0
      %1369 = vmatpush2.msra.mxu0 0.0
      %1370 = vmatprep.mubr.f32.mxu0 0.0
      %1371 = vmatmul.mubr.f32.gmra.mxu0 %v1298
      %v1372 = vpop.f32.mrf.mxu0
      %v1373 = vadd.f32 0.0, %v1372
      %v1374 = vpop.f32.mrf.mxu0
      %1375 = vmatprep.mubr.f32.mxu0 0.0
      %1376 = vmatmul.mubr.f32.gmra.mxu0 %v1301
      %v1377 = vpop.f32.mrf.mxu0
      %v1378 = vadd.f32 0.0, %v1377
      %v1379 = vpop.f32.mrf.mxu0
      %1380 = vdwg.mxu0
      %v1381 = vmax.f32 %v1373, 0.0
      %v1382 = vmax.f32 %v1378, 0.0
      %v1385 = vrot.slane %v1381, 5
      %v1386 = vrot.slane %v1382, 5
      %v1387 = vsel %vm640, %v1385, %v1386
      %v1390 = vsel %vm640, 0.0, %v1385
      %v1391 = vsel %vm640, %v1386, 0.0
      %v1392 = vld [vmem:[%s5] sm:$0x3f]
      %s1393 = scalar_lea.vmem %s5, 8
      %v1394 = vld [vmem:[%s1393] sm:$0x3f]
      %v1397 = vrot.slane %v1390, 1
      %v1398 = vrot.slane %v1387, 1
      %v1399 = vsel %vm653, %v1397, %v1398
      %v1400 = vrot.slane %v1391, 1
      %v1401 = vsel %vm653, %v1398, %v1400
      %vm1402 = vcmask 48128
      %v1403 = vsel %vm1402, %v1399, 0
      %v1405 = vsel %vm1402, %v1401, 0
      %v1408 = vsel %vm827, %v1394, 0
      %1410 = vmatprep.subr.mxu0 0.0
      %1411 = vmatpush1.msra.mxu0 0.0
      %1412 = vmatprep.subr.mxu0 0.0
      %1413 = vmatpush1.msra.mxu0 0.0
      %1414 = vmatprep.subr.mxu0 0.0
      %1415 = vmatpush1.msra.mxu0 0.0
      %1416 = vmatprep.subr.mxu0 0.0
      %1417 = vmatpush1.msra.mxu0 0.0
      %1418 = vmatprep.subr.mxu0 0.0
      %1419 = vmatpush1.msra.mxu0 0.0
      %1420 = vmatprep.subr.mxu0 0.0
      %1421 = vmatpush1.msra.mxu0 0.0
      %1422 = vmatprep.subr.mxu0 0.0
      %1423 = vmatpush1.msra.mxu0 0.0
      %1424 = vmatprep.subr.mxu0 0.0
      %1425 = vmatpush1.msra.mxu0 0.0
      %1426 = vmatprep.subr.mxu0 0.0
      %1427 = vmatpush1.msra.mxu0 0.0
      %1428 = vmatprep.subr.mxu0 0.0
      %1429 = vmatpush1.msra.mxu0 0.0
      %1430 = vmatprep.subr.mxu0 0.0
      %1431 = vmatpush1.msra.mxu0 0.0
      %1432 = vmatprep.subr.mxu0 0.0
      %1433 = vmatpush1.msra.mxu0 0.0
      %1434 = vmatprep.subr.mxu0 0.0
      %1435 = vmatpush1.msra.mxu0 0.0
      %1436 = vmatprep.subr.mxu0 0.0
      %1437 = vmatpush1.msra.mxu0 0.0
      %1438 = vmatprep.subr.mxu0 0.0
      %1439 = vmatpush1.msra.mxu0 0.0
      %1440 = vmatprep.subr.mxu0 0.0
      %1441 = vmatpush1.msra.mxu0 %v1408
      %1442 = vmatprep.subr.mxu0 0.0
      %1443 = vmatpush2.msra.mxu0 0.0
      %1444 = vmatprep.subr.mxu0 0.0
      %1445 = vmatpush2.msra.mxu0 0.0
      %1446 = vmatprep.subr.mxu0 0.0
      %1447 = vmatpush2.msra.mxu0 0.0
      %1448 = vmatprep.subr.mxu0 0.0
      %1449 = vmatpush2.msra.mxu0 0.0
      %1450 = vmatprep.subr.mxu0 0.0
      %1451 = vmatpush2.msra.mxu0 0.0
      %1452 = vmatprep.subr.mxu0 0.0
      %1453 = vmatpush2.msra.mxu0 0.0
      %1454 = vmatprep.subr.mxu0 0.0
      %1455 = vmatpush2.msra.mxu0 0.0
      %1456 = vmatprep.subr.mxu0 0.0
      %1457 = vmatpush2.msra.mxu0 0.0
      %1458 = vmatprep.subr.mxu0 0.0
      %1459 = vmatpush2.msra.mxu0 0.0
      %1460 = vmatprep.subr.mxu0 0.0
      %1461 = vmatpush2.msra.mxu0 0.0
      %1462 = vmatprep.subr.mxu0 0.0
      %1463 = vmatpush2.msra.mxu0 0.0
      %1464 = vmatprep.subr.mxu0 0.0
      %1465 = vmatpush2.msra.mxu0 0.0
      %1466 = vmatprep.subr.mxu0 0.0
      %1467 = vmatpush2.msra.mxu0 0.0
      %1468 = vmatprep.subr.mxu0 0.0
      %1469 = vmatpush2.msra.mxu0 0.0
      %1470 = vmatprep.subr.mxu0 0.0
      %1471 = vmatpush2.msra.mxu0 0.0
      %1472 = vmatprep.subr.mxu0 0.0
      %1473 = vmatpush2.msra.mxu0 0.0
      %1474 = vmatprep.mubr.f32.mxu0 0.0
      %1475 = vmatmul.mubr.f32.gmra.mxu0 %v1403
      %v1476 = vpop.f32.mrf.mxu0
      %v1477 = vadd.f32 0.0, %v1476
      %v1478 = vpop.f32.mrf.mxu0
      %1479 = vmatprep.mubr.f32.mxu0 0.0
      %1480 = vmatmul.mubr.f32.gmra.mxu0 %v1405
      %v1481 = vpop.f32.mrf.mxu0
      %v1482 = vadd.f32 0.0, %v1481
      %v1483 = vpop.f32.mrf.mxu0
      %1484 = vdwg.mxu0
      %v1485 = vsel %vm1402, %v1390, 0
      %v1487 = vsel %vm1402, %v1387, 0
      %v1490 = vsel %vm827, %v1392, 0
      %1492 = vmatprep.subr.mxu0 0.0
      %1493 = vmatpush1.msra.mxu0 0.0
      %1494 = vmatprep.subr.mxu0 0.0
      %1495 = vmatpush1.msra.mxu0 0.0
      %1496 = vmatprep.subr.mxu0 0.0
      %1497 = vmatpush1.msra.mxu0 0.0
      %1498 = vmatprep.subr.mxu0 0.0
      %1499 = vmatpush1.msra.mxu0 0.0
      %1500 = vmatprep.subr.mxu0 0.0
      %1501 = vmatpush1.msra.mxu0 0.0
      %1502 = vmatprep.subr.mxu0 0.0
      %1503 = vmatpush1.msra.mxu0 0.0
      %1504 = vmatprep.subr.mxu0 0.0
      %1505 = vmatpush1.msra.mxu0 0.0
      %1506 = vmatprep.subr.mxu0 0.0
      %1507 = vmatpush1.msra.mxu0 0.0
      %1508 = vmatprep.subr.mxu0 0.0
      %1509 = vmatpush1.msra.mxu0 0.0
      %1510 = vmatprep.subr.mxu0 0.0
      %1511 = vmatpush1.msra.mxu0 0.0
      %1512 = vmatprep.subr.mxu0 0.0
      %1513 = vmatpush1.msra.mxu0 0.0
      %1514 = vmatprep.subr.mxu0 0.0
      %1515 = vmatpush1.msra.mxu0 0.0
      %1516 = vmatprep.subr.mxu0 0.0
      %1517 = vmatpush1.msra.mxu0 0.0
      %1518 = vmatprep.subr.mxu0 0.0
      %1519 = vmatpush1.msra.mxu0 0.0
      %1520 = vmatprep.subr.mxu0 0.0
      %1521 = vmatpush1.msra.mxu0 0.0
      %1522 = vmatprep.subr.mxu0 0.0
      %1523 = vmatpush1.msra.mxu0 %v1490
      %1524 = vmatprep.subr.mxu0 0.0
      %1525 = vmatpush2.msra.mxu0 0.0
      %1526 = vmatprep.subr.mxu0 0.0
      %1527 = vmatpush2.msra.mxu0 0.0
      %1528 = vmatprep.subr.mxu0 0.0
      %1529 = vmatpush2.msra.mxu0 0.0
      %1530 = vmatprep.subr.mxu0 0.0
      %1531 = vmatpush2.msra.mxu0 0.0
      %1532 = vmatprep.subr.mxu0 0.0
      %1533 = vmatpush2.msra.mxu0 0.0
      %1534 = vmatprep.subr.mxu0 0.0
      %1535 = vmatpush2.msra.mxu0 0.0
      %1536 = vmatprep.subr.mxu0 0.0
      %1537 = vmatpush2.msra.mxu0 0.0
      %1538 = vmatprep.subr.mxu0 0.0
      %1539 = vmatpush2.msra.mxu0 0.0
      %1540 = vmatprep.subr.mxu0 0.0
      %1541 = vmatpush2.msra.mxu0 0.0
      %1542 = vmatprep.subr.mxu0 0.0
      %1543 = vmatpush2.msra.mxu0 0.0
      %1544 = vmatprep.subr.mxu0 0.0
      %1545 = vmatpush2.msra.mxu0 0.0
      %1546 = vmatprep.subr.mxu0 0.0
      %1547 = vmatpush2.msra.mxu0 0.0
      %1548 = vmatprep.subr.mxu0 0.0
      %1549 = vmatpush2.msra.mxu0 0.0
      %1550 = vmatprep.subr.mxu0 0.0
      %1551 = vmatpush2.msra.mxu0 0.0
      %1552 = vmatprep.subr.mxu0 0.0
      %1553 = vmatpush2.msra.mxu0 0.0
      %1554 = vmatprep.subr.mxu0 0.0
      %1555 = vmatpush2.msra.mxu0 0.0
      %1556 = vmatprep.mubr.f32.mxu0 0.0
      %1557 = vmatmul.mubr.f32.gmra.mxu0 %v1485
      %v1558 = vpop.f32.mrf.mxu0
      %v1559 = vadd.f32 %v1477, %v1558
      %v1560 = vpop.f32.mrf.mxu0
      %1561 = vmatprep.mubr.f32.mxu0 0.0
      %1562 = vmatmul.mubr.f32.gmra.mxu0 %v1487
      %v1563 = vpop.f32.mrf.mxu0
      %v1564 = vadd.f32 %v1482, %v1563
      %v1565 = vpop.f32.mrf.mxu0
      %1566 = vdwg.mxu0
      %s1567 = scalar_lea.vmem %s5, 16
      %v1568 = vld [vmem:[%s1567] sm:$0x3f]
      %v1569 = vrot.slane %v1390, 2
      %v1570 = vrot.slane %v1387, 2
      %v1571 = vsel %vm827, %v1569, %v1570
      %v1572 = vrot.slane %v1391, 2
      %v1573 = vsel %vm827, %v1570, %v1572
      %v1574 = vsel %vm1402, %v1571, 0
      %v1576 = vsel %vm1402, %v1573, 0
      %v1579 = vsel %vm827, %v1568, 0
      %1581 = vmatprep.subr.mxu0 0.0
      %1582 = vmatpush1.msra.mxu0 0.0
      %1583 = vmatprep.subr.mxu0 0.0
      %1584 = vmatpush1.msra.mxu0 0.0
      %1585 = vmatprep.subr.mxu0 0.0
      %1586 = vmatpush1.msra.mxu0 0.0
      %1587 = vmatprep.subr.mxu0 0.0
      %1588 = vmatpush1.msra.mxu0 0.0
      %1589 = vmatprep.subr.mxu0 0.0
      %1590 = vmatpush1.msra.mxu0 0.0
      %1591 = vmatprep.subr.mxu0 0.0
      %1592 = vmatpush1.msra.mxu0 0.0
      %1593 = vmatprep.subr.mxu0 0.0
      %1594 = vmatpush1.msra.mxu0 0.0
      %1595 = vmatprep.subr.mxu0 0.0
      %1596 = vmatpush1.msra.mxu0 0.0
      %1597 = vmatprep.subr.mxu0 0.0
      %1598 = vmatpush1.msra.mxu0 0.0
      %1599 = vmatprep.subr.mxu0 0.0
      %1600 = vmatpush1.msra.mxu0 0.0
      %1601 = vmatprep.subr.mxu0 0.0
      %1602 = vmatpush1.msra.mxu0 0.0
      %1603 = vmatprep.subr.mxu0 0.0
      %1604 = vmatpush1.msra.mxu0 0.0
      %1605 = vmatprep.subr.mxu0 0.0
      %1606 = vmatpush1.msra.mxu0 0.0
      %1607 = vmatprep.subr.mxu0 0.0
      %1608 = vmatpush1.msra.mxu0 0.0
      %1609 = vmatprep.subr.mxu0 0.0
      %1610 = vmatpush1.msra.mxu0 0.0
      %1611 = vmatprep.subr.mxu0 0.0
      %1612 = vmatpush1.msra.mxu0 %v1579
      %1613 = vmatprep.subr.mxu0 0.0
      %1614 = vmatpush2.msra.mxu0 0.0
      %1615 = vmatprep.subr.mxu0 0.0
      %1616 = vmatpush2.msra.mxu0 0.0
      %1617 = vmatprep.subr.mxu0 0.0
      %1618 = vmatpush2.msra.mxu0 0.0
      %1619 = vmatprep.subr.mxu0 0.0
      %1620 = vmatpush2.msra.mxu0 0.0
      %1621 = vmatprep.subr.mxu0 0.0
      %1622 = vmatpush2.msra.mxu0 0.0
      %1623 = vmatprep.subr.mxu0 0.0
      %1624 = vmatpush2.msra.mxu0 0.0
      %1625 = vmatprep.subr.mxu0 0.0
      %1626 = vmatpush2.msra.mxu0 0.0
      %1627 = vmatprep.subr.mxu0 0.0
      %1628 = vmatpush2.msra.mxu0 0.0
      %1629 = vmatprep.subr.mxu0 0.0
      %1630 = vmatpush2.msra.mxu0 0.0
      %1631 = vmatprep.subr.mxu0 0.0
      %1632 = vmatpush2.msra.mxu0 0.0
      %1633 = vmatprep.subr.mxu0 0.0
      %1634 = vmatpush2.msra.mxu0 0.0
      %1635 = vmatprep.subr.mxu0 0.0
      %1636 = vmatpush2.msra.mxu0 0.0
      %1637 = vmatprep.subr.mxu0 0.0
      %1638 = vmatpush2.msra.mxu0 0.0
      %1639 = vmatprep.subr.mxu0 0.0
      %1640 = vmatpush2.msra.mxu0 0.0
      %1641 = vmatprep.subr.mxu0 0.0
      %1642 = vmatpush2.msra.mxu0 0.0
      %1643 = vmatprep.subr.mxu0 0.0
      %1644 = vmatpush2.msra.mxu0 0.0
      %1645 = vmatprep.mubr.f32.mxu0 0.0
      %1646 = vmatmul.mubr.f32.gmra.mxu0 %v1574
      %v1647 = vpop.f32.mrf.mxu0
      %v1648 = vadd.f32 0.0, %v1647
      %v1649 = vpop.f32.mrf.mxu0
      %1650 = vmatprep.mubr.f32.mxu0 0.0
      %1651 = vmatmul.mubr.f32.gmra.mxu0 %v1576
      %v1652 = vpop.f32.mrf.mxu0
      %v1653 = vadd.f32 0.0, %v1652
      %v1654 = vpop.f32.mrf.mxu0
      %1655 = vdwg.mxu0
      %v1656 = vadd.f32 %v1559, %v1648
      %v1657 = vadd.f32 %v1564, %v1653
      %s1658 = scalar_lea.vmem %s5, 24
      %v1659 = vld [vmem:[%s1658] sm:$0x3f]
      %v1660 = vrot.slane %v1390, 3
      %v1661 = vrot.slane %v1387, 3
      %v1662 = vsel %vm919, %v1660, %v1661
      %v1663 = vrot.slane %v1391, 3
      %v1664 = vsel %vm919, %v1661, %v1663
      %v1665 = vsel %vm1402, %v1662, 0
      %v1667 = vsel %vm1402, %v1664, 0
      %v1670 = vsel %vm827, %v1659, 0
      %1672 = vmatprep.subr.mxu0 0.0
      %1673 = vmatpush1.msra.mxu0 0.0
      %1674 = vmatprep.subr.mxu0 0.0
      %1675 = vmatpush1.msra.mxu0 0.0
      %1676 = vmatprep.subr.mxu0 0.0
      %1677 = vmatpush1.msra.mxu0 0.0
      %1678 = vmatprep.subr.mxu0 0.0
      %1679 = vmatpush1.msra.mxu0 0.0
      %1680 = vmatprep.subr.mxu0 0.0
      %1681 = vmatpush1.msra.mxu0 0.0
      %1682 = vmatprep.subr.mxu0 0.0
      %1683 = vmatpush1.msra.mxu0 0.0
      %1684 = vmatprep.subr.mxu0 0.0
      %1685 = vmatpush1.msra.mxu0 0.0
      %1686 = vmatprep.subr.mxu0 0.0
      %1687 = vmatpush1.msra.mxu0 0.0
      %1688 = vmatprep.subr.mxu0 0.0
      %1689 = vmatpush1.msra.mxu0 0.0
      %1690 = vmatprep.subr.mxu0 0.0
      %1691 = vmatpush1.msra.mxu0 0.0
      %1692 = vmatprep.subr.mxu0 0.0
      %1693 = vmatpush1.msra.mxu0 0.0
      %1694 = vmatprep.subr.mxu0 0.0
      %1695 = vmatpush1.msra.mxu0 0.0
      %1696 = vmatprep.subr.mxu0 0.0
      %1697 = vmatpush1.msra.mxu0 0.0
      %1698 = vmatprep.subr.mxu0 0.0
      %1699 = vmatpush1.msra.mxu0 0.0
      %1700 = vmatprep.subr.mxu0 0.0
      %1701 = vmatpush1.msra.mxu0 0.0
      %1702 = vmatprep.subr.mxu0 0.0
      %1703 = vmatpush1.msra.mxu0 %v1670
      %1704 = vmatprep.subr.mxu0 0.0
      %1705 = vmatpush2.msra.mxu0 0.0
      %1706 = vmatprep.subr.mxu0 0.0
      %1707 = vmatpush2.msra.mxu0 0.0
      %1708 = vmatprep.subr.mxu0 0.0
      %1709 = vmatpush2.msra.mxu0 0.0
      %1710 = vmatprep.subr.mxu0 0.0
      %1711 = vmatpush2.msra.mxu0 0.0
      %1712 = vmatprep.subr.mxu0 0.0
      %1713 = vmatpush2.msra.mxu0 0.0
      %1714 = vmatprep.subr.mxu0 0.0
      %1715 = vmatpush2.msra.mxu0 0.0
      %1716 = vmatprep.subr.mxu0 0.0
      %1717 = vmatpush2.msra.mxu0 0.0
      %1718 = vmatprep.subr.mxu0 0.0
      %1719 = vmatpush2.msra.mxu0 0.0
      %1720 = vmatprep.subr.mxu0 0.0
      %1721 = vmatpush2.msra.mxu0 0.0
      %1722 = vmatprep.subr.mxu0 0.0
      %1723 = vmatpush2.msra.mxu0 0.0
      %1724 = vmatprep.subr.mxu0 0.0
      %1725 = vmatpush2.msra.mxu0 0.0
      %1726 = vmatprep.subr.mxu0 0.0
      %1727 = vmatpush2.msra.mxu0 0.0
      %1728 = vmatprep.subr.mxu0 0.0
      %1729 = vmatpush2.msra.mxu0 0.0
      %1730 = vmatprep.subr.mxu0 0.0
      %1731 = vmatpush2.msra.mxu0 0.0
      %1732 = vmatprep.subr.mxu0 0.0
      %1733 = vmatpush2.msra.mxu0 0.0
      %1734 = vmatprep.subr.mxu0 0.0
      %1735 = vmatpush2.msra.mxu0 0.0
      %1736 = vmatprep.mubr.f32.mxu0 0.0
      %1737 = vmatmul.mubr.f32.gmra.mxu0 %v1665
      %v1738 = vpop.f32.mrf.mxu0
      %v1739 = vadd.f32 0.0, %v1738
      %v1740 = vpop.f32.mrf.mxu0
      %1741 = vmatprep.mubr.f32.mxu0 0.0
      %1742 = vmatmul.mubr.f32.gmra.mxu0 %v1667
      %v1743 = vpop.f32.mrf.mxu0
      %v1744 = vadd.f32 0.0, %v1743
      %v1745 = vpop.f32.mrf.mxu0
      %1746 = vdwg.mxu0
      %v1747 = vadd.f32 %v1656, %v1739
      %v1748 = vadd.f32 %v1657, %v1744
      %s1749 = scalar_lea.vmem %s5, 32
      %v1750 = vld [vmem:[%s1749] sm:$0x3f]
      %v1751 = vrot.slane %v1390, 4
      %v1752 = vrot.slane %v1387, 4
      %v1753 = vsel %vm664, %v1751, %v1752
      %v1754 = vrot.slane %v1391, 4
      %v1755 = vsel %vm664, %v1752, %v1754
      %v1756 = vsel %vm1402, %v1753, 0
      %v1758 = vsel %vm1402, %v1755, 0
      %v1761 = vsel %vm827, %v1750, 0
      %1763 = vmatprep.subr.mxu0 0.0
      %1764 = vmatpush1.msra.mxu0 0.0
      %1765 = vmatprep.subr.mxu0 0.0
      %1766 = vmatpush1.msra.mxu0 0.0
      %1767 = vmatprep.subr.mxu0 0.0
      %1768 = vmatpush1.msra.mxu0 0.0
      %1769 = vmatprep.subr.mxu0 0.0
      %1770 = vmatpush1.msra.mxu0 0.0
      %1771 = vmatprep.subr.mxu0 0.0
      %1772 = vmatpush1.msra.mxu0 0.0
      %1773 = vmatprep.subr.mxu0 0.0
      %1774 = vmatpush1.msra.mxu0 0.0
      %1775 = vmatprep.subr.mxu0 0.0
      %1776 = vmatpush1.msra.mxu0 0.0
      %1777 = vmatprep.subr.mxu0 0.0
      %1778 = vmatpush1.msra.mxu0 0.0
      %1779 = vmatprep.subr.mxu0 0.0
      %1780 = vmatpush1.msra.mxu0 0.0
      %1781 = vmatprep.subr.mxu0 0.0
      %1782 = vmatpush1.msra.mxu0 0.0
      %1783 = vmatprep.subr.mxu0 0.0
      %1784 = vmatpush1.msra.mxu0 0.0
      %1785 = vmatprep.subr.mxu0 0.0
      %1786 = vmatpush1.msra.mxu0 0.0
      %1787 = vmatprep.subr.mxu0 0.0
      %1788 = vmatpush1.msra.mxu0 0.0
      %1789 = vmatprep.subr.mxu0 0.0
      %1790 = vmatpush1.msra.mxu0 0.0
      %1791 = vmatprep.subr.mxu0 0.0
      %1792 = vmatpush1.msra.mxu0 0.0
      %1793 = vmatprep.subr.mxu0 0.0
      %1794 = vmatpush1.msra.mxu0 %v1761
      %1795 = vmatprep.subr.mxu0 0.0
      %1796 = vmatpush2.msra.mxu0 0.0
      %1797 = vmatprep.subr.mxu0 0.0
      %1798 = vmatpush2.msra.mxu0 0.0
      %1799 = vmatprep.subr.mxu0 0.0
      %1800 = vmatpush2.msra.mxu0 0.0
      %1801 = vmatprep.subr.mxu0 0.0
      %1802 = vmatpush2.msra.mxu0 0.0
      %1803 = vmatprep.subr.mxu0 0.0
      %1804 = vmatpush2.msra.mxu0 0.0
      %1805 = vmatprep.subr.mxu0 0.0
      %1806 = vmatpush2.msra.mxu0 0.0
      %1807 = vmatprep.subr.mxu0 0.0
      %1808 = vmatpush2.msra.mxu0 0.0
      %1809 = vmatprep.subr.mxu0 0.0
      %1810 = vmatpush2.msra.mxu0 0.0
      %1811 = vmatprep.subr.mxu0 0.0
      %1812 = vmatpush2.msra.mxu0 0.0
      %1813 = vmatprep.subr.mxu0 0.0
      %1814 = vmatpush2.msra.mxu0 0.0
      %1815 = vmatprep.subr.mxu0 0.0
      %1816 = vmatpush2.msra.mxu0 0.0
      %1817 = vmatprep.subr.mxu0 0.0
      %1818 = vmatpush2.msra.mxu0 0.0
      %1819 = vmatprep.subr.mxu0 0.0
      %1820 = vmatpush2.msra.mxu0 0.0
      %1821 = vmatprep.subr.mxu0 0.0
      %1822 = vmatpush2.msra.mxu0 0.0
      %1823 = vmatprep.subr.mxu0 0.0
      %1824 = vmatpush2.msra.mxu0 0.0
      %1825 = vmatprep.subr.mxu0 0.0
      %1826 = vmatpush2.msra.mxu0 0.0
      %1827 = vmatprep.mubr.f32.mxu0 0.0
      %1828 = vmatmul.mubr.f32.gmra.mxu0 %v1756
      %v1829 = vpop.f32.mrf.mxu0
      %v1830 = vadd.f32 0.0, %v1829
      %v1831 = vpop.f32.mrf.mxu0
      %1832 = vmatprep.mubr.f32.mxu0 0.0
      %1833 = vmatmul.mubr.f32.gmra.mxu0 %v1758
      %v1834 = vpop.f32.mrf.mxu0
      %v1835 = vadd.f32 0.0, %v1834
      %v1836 = vpop.f32.mrf.mxu0
      %1837 = vdwg.mxu0
      %v1838 = vadd.f32 %v1747, %v1830
      %v1839 = vadd.f32 %v1748, %v1835
      %s1840 = scalar_lea.vmem %s5, 40
      %v1841 = vld [vmem:[%s1840] sm:$0x3f]
      %v1842 = vrot.slane %v1390, 5
      %v1843 = vrot.slane %v1387, 5
      %v1844 = vsel %vm640, %v1842, %v1843
      %v1845 = vrot.slane %v1391, 5
      %v1846 = vsel %vm640, %v1843, %v1845
      %v1847 = vsel %vm1402, %v1844, 0
      %v1849 = vsel %vm1402, %v1846, 0
      %v1852 = vsel %vm827, %v1841, 0
      %1854 = vmatprep.subr.mxu0 0.0
      %1855 = vmatpush1.msra.mxu0 0.0
      %1856 = vmatprep.subr.mxu0 0.0
      %1857 = vmatpush1.msra.mxu0 0.0
      %1858 = vmatprep.subr.mxu0 0.0
      %1859 = vmatpush1.msra.mxu0 0.0
      %1860 = vmatprep.subr.mxu0 0.0
      %1861 = vmatpush1.msra.mxu0 0.0
      %1862 = vmatprep.subr.mxu0 0.0
      %1863 = vmatpush1.msra.mxu0 0.0
      %1864 = vmatprep.subr.mxu0 0.0
      %1865 = vmatpush1.msra.mxu0 0.0
      %1866 = vmatprep.subr.mxu0 0.0
      %1867 = vmatpush1.msra.mxu0 0.0
      %1868 = vmatprep.subr.mxu0 0.0
      %1869 = vmatpush1.msra.mxu0 0.0
      %1870 = vmatprep.subr.mxu0 0.0
      %1871 = vmatpush1.msra.mxu0 0.0
      %1872 = vmatprep.subr.mxu0 0.0
      %1873 = vmatpush1.msra.mxu0 0.0
      %1874 = vmatprep.subr.mxu0 0.0
      %1875 = vmatpush1.msra.mxu0 0.0
      %1876 = vmatprep.subr.mxu0 0.0
      %1877 = vmatpush1.msra.mxu0 0.0
      %1878 = vmatprep.subr.mxu0 0.0
      %1879 = vmatpush1.msra.mxu0 0.0
      %1880 = vmatprep.subr.mxu0 0.0
      %1881 = vmatpush1.msra.mxu0 0.0
      %1882 = vmatprep.subr.mxu0 0.0
      %1883 = vmatpush1.msra.mxu0 0.0
      %1884 = vmatprep.subr.mxu0 0.0
      %1885 = vmatpush1.msra.mxu0 %v1852
      %1886 = vmatprep.subr.mxu0 0.0
      %1887 = vmatpush2.msra.mxu0 0.0
      %1888 = vmatprep.subr.mxu0 0.0
      %1889 = vmatpush2.msra.mxu0 0.0
      %1890 = vmatprep.subr.mxu0 0.0
      %1891 = vmatpush2.msra.mxu0 0.0
      %1892 = vmatprep.subr.mxu0 0.0
      %1893 = vmatpush2.msra.mxu0 0.0
      %1894 = vmatprep.subr.mxu0 0.0
      %1895 = vmatpush2.msra.mxu0 0.0
      %1896 = vmatprep.subr.mxu0 0.0
      %1897 = vmatpush2.msra.mxu0 0.0
      %1898 = vmatprep.subr.mxu0 0.0
      %1899 = vmatpush2.msra.mxu0 0.0
      %1900 = vmatprep.subr.mxu0 0.0
      %1901 = vmatpush2.msra.mxu0 0.0
      %1902 = vmatprep.subr.mxu0 0.0
      %1903 = vmatpush2.msra.mxu0 0.0
      %1904 = vmatprep.subr.mxu0 0.0
      %1905 = vmatpush2.msra.mxu0 0.0
      %1906 = vmatprep.subr.mxu0 0.0
      %1907 = vmatpush2.msra.mxu0 0.0
      %1908 = vmatprep.subr.mxu0 0.0
      %1909 = vmatpush2.msra.mxu0 0.0
      %1910 = vmatprep.subr.mxu0 0.0
      %1911 = vmatpush2.msra.mxu0 0.0
      %1912 = vmatprep.subr.mxu0 0.0
      %1913 = vmatpush2.msra.mxu0 0.0
      %1914 = vmatprep.subr.mxu0 0.0
      %1915 = vmatpush2.msra.mxu0 0.0
      %1916 = vmatprep.subr.mxu0 0.0
      %1917 = vmatpush2.msra.mxu0 0.0
      %1918 = vmatprep.mubr.f32.mxu0 0.0
      %1919 = vmatmul.mubr.f32.gmra.mxu0 %v1847
      %v1920 = vpop.f32.mrf.mxu0
      %v1921 = vadd.f32 0.0, %v1920
      %v1922 = vpop.f32.mrf.mxu0
      %1923 = vmatprep.mubr.f32.mxu0 0.0
      %1924 = vmatmul.mubr.f32.gmra.mxu0 %v1849
      %v1925 = vpop.f32.mrf.mxu0
      %v1926 = vadd.f32 0.0, %v1925
      %v1927 = vpop.f32.mrf.mxu0
      %1928 = vdwg.mxu0
      %v1929 = vadd.f32 %v1838, %v1921
      %v1930 = vadd.f32 %v1839, %v1926
      %s1931 = scalar_lea.vmem %s5, 48
      %v1932 = vld [vmem:[%s1931] sm:$0x3f]
      %v1933 = vrot.slane %v1390, 6
      %v1934 = vrot.slane %v1387, 6
      %v1935 = vsel %vm1193, %v1933, %v1934
      %v1936 = vrot.slane %v1391, 6
      %v1937 = vsel %vm1193, %v1934, %v1936
      %v1938 = vsel %vm1402, %v1935, 0
      %v1940 = vsel %vm1402, %v1937, 0
      %v1943 = vsel %vm827, %v1932, 0
      %1945 = vmatprep.subr.mxu0 0.0
      %1946 = vmatpush1.msra.mxu0 0.0
      %1947 = vmatprep.subr.mxu0 0.0
      %1948 = vmatpush1.msra.mxu0 0.0
      %1949 = vmatprep.subr.mxu0 0.0
      %1950 = vmatpush1.msra.mxu0 0.0
      %1951 = vmatprep.subr.mxu0 0.0
      %1952 = vmatpush1.msra.mxu0 0.0
      %1953 = vmatprep.subr.mxu0 0.0
      %1954 = vmatpush1.msra.mxu0 0.0
      %1955 = vmatprep.subr.mxu0 0.0
      %1956 = vmatpush1.msra.mxu0 0.0
      %1957 = vmatprep.subr.mxu0 0.0
      %1958 = vmatpush1.msra.mxu0 0.0
      %1959 = vmatprep.subr.mxu0 0.0
      %1960 = vmatpush1.msra.mxu0 0.0
      %1961 = vmatprep.subr.mxu0 0.0
      %1962 = vmatpush1.msra.mxu0 0.0
      %1963 = vmatprep.subr.mxu0 0.0
      %1964 = vmatpush1.msra.mxu0 0.0
      %1965 = vmatprep.subr.mxu0 0.0
      %1966 = vmatpush1.msra.mxu0 0.0
      %1967 = vmatprep.subr.mxu0 0.0
      %1968 = vmatpush1.msra.mxu0 0.0
      %1969 = vmatprep.subr.mxu0 0.0
      %1970 = vmatpush1.msra.mxu0 0.0
      %1971 = vmatprep.subr.mxu0 0.0
      %1972 = vmatpush1.msra.mxu0 0.0
      %1973 = vmatprep.subr.mxu0 0.0
      %1974 = vmatpush1.msra.mxu0 0.0
      %1975 = vmatprep.subr.mxu0 0.0
      %1976 = vmatpush1.msra.mxu0 %v1943
      %1977 = vmatprep.subr.mxu0 0.0
      %1978 = vmatpush2.msra.mxu0 0.0
      %1979 = vmatprep.subr.mxu0 0.0
      %1980 = vmatpush2.msra.mxu0 0.0
      %1981 = vmatprep.subr.mxu0 0.0
      %1982 = vmatpush2.msra.mxu0 0.0
      %1983 = vmatprep.subr.mxu0 0.0
      %1984 = vmatpush2.msra.mxu0 0.0
      %1985 = vmatprep.subr.mxu0 0.0
      %1986 = vmatpush2.msra.mxu0 0.0
      %1987 = vmatprep.subr.mxu0 0.0
      %1988 = vmatpush2.msra.mxu0 0.0
      %1989 = vmatprep.subr.mxu0 0.0
      %1990 = vmatpush2.msra.mxu0 0.0
      %1991 = vmatprep.subr.mxu0 0.0
      %1992 = vmatpush2.msra.mxu0 0.0
      %1993 = vmatprep.subr.mxu0 0.0
      %1994 = vmatpush2.msra.mxu0 0.0
      %1995 = vmatprep.subr.mxu0 0.0
      %1996 = vmatpush2.msra.mxu0 0.0
      %1997 = vmatprep.subr.mxu0 0.0
      %1998 = vmatpush2.msra.mxu0 0.0
      %1999 = vmatprep.subr.mxu0 0.0
      %2000 = vmatpush2.msra.mxu0 0.0
      %2001 = vmatprep.subr.mxu0 0.0
      %2002 = vmatpush2.msra.mxu0 0.0
      %2003 = vmatprep.subr.mxu0 0.0
      %2004 = vmatpush2.msra.mxu0 0.0
      %2005 = vmatprep.subr.mxu0 0.0
      %2006 = vmatpush2.msra.mxu0 0.0
      %2007 = vmatprep.subr.mxu0 0.0
      %2008 = vmatpush2.msra.mxu0 0.0
      %2009 = vmatprep.mubr.f32.mxu0 0.0
      %2010 = vmatmul.mubr.f32.gmra.mxu0 %v1938
      %v2011 = vpop.f32.mrf.mxu0
      %v2012 = vadd.f32 0.0, %v2011
      %v2013 = vpop.f32.mrf.mxu0
      %2014 = vmatprep.mubr.f32.mxu0 0.0
      %2015 = vmatmul.mubr.f32.gmra.mxu0 %v1940
      %v2016 = vpop.f32.mrf.mxu0
      %v2017 = vadd.f32 0.0, %v2016
      %v2018 = vpop.f32.mrf.mxu0
      %2019 = vdwg.mxu0
      %v2020 = vadd.f32 %v1929, %v2012
      %v2021 = vadd.f32 %v1930, %v2017
      %v2022 = vld [vmem:[%s6] sm:$0x1]
      %v2024 = vlaneseq
      %v2025 = vshrl.u32 %v2024, 7
      %v2026 = vsub.s32 0, %v2025
      %v2027 = vrot.slane %v2022, %v2026
      %v2029 = vadd.f32 %v2020, %v2027
      %v2030 = vadd.f32 %v2021, %v2027
      %v2031 = vmax.f32 %v2029, 0.0
      %v2032 = vmax.f32 %v2030, 0.0
      %v2033 = vld [vmem:[%s7] sm:$0xff]
      %v2034 = vld [vmem:[%s7 + $0x8] sm:$0xf]
      %v2036 = vsel %vm1296, %v2031, 0
      %v2039 = vsel %vm1296, %v2032, 0
      %v2042 = vsel %vm664, %v2034, 0
      %2044 = vmatprep.subr.mxu0 0.0
      %2045 = vmatpush1.msra.mxu0 0.0
      %2046 = vmatprep.subr.mxu0 0.0
      %2047 = vmatpush1.msra.mxu0 0.0
      %2048 = vmatprep.subr.mxu0 0.0
      %2049 = vmatpush1.msra.mxu0 0.0
      %2050 = vmatprep.subr.mxu0 0.0
      %2051 = vmatpush1.msra.mxu0 0.0
      %2052 = vmatprep.subr.mxu0 0.0
      %2053 = vmatpush1.msra.mxu0 0.0
      %2054 = vmatprep.subr.mxu0 0.0
      %2055 = vmatpush1.msra.mxu0 0.0
      %2056 = vmatprep.subr.mxu0 0.0
      %2057 = vmatpush1.msra.mxu0 0.0
      %2058 = vmatprep.subr.mxu0 0.0
      %2059 = vmatpush1.msra.mxu0 0.0
      %2060 = vmatprep.subr.mxu0 0.0
      %2061 = vmatpush1.msra.mxu0 0.0
      %2062 = vmatprep.subr.mxu0 0.0
      %2063 = vmatpush1.msra.mxu0 0.0
      %2064 = vmatprep.subr.mxu0 0.0
      %2065 = vmatpush1.msra.mxu0 0.0
      %2066 = vmatprep.subr.mxu0 0.0
      %2067 = vmatpush1.msra.mxu0 0.0
      %2068 = vmatprep.subr.mxu0 0.0
      %2069 = vmatpush1.msra.mxu0 0.0
      %2070 = vmatprep.subr.mxu0 0.0
      %2071 = vmatpush1.msra.mxu0 0.0
      %2072 = vmatprep.subr.mxu0 0.0
      %2073 = vmatpush1.msra.mxu0 %v2042
      %2074 = vmatprep.subr.mxu0 0.0
      %2075 = vmatpush1.msra.mxu0 %v2033
      %2076 = vmatprep.subr.mxu0 0.0
      %2077 = vmatpush2.msra.mxu0 0.0
      %2078 = vmatprep.subr.mxu0 0.0
      %2079 = vmatpush2.msra.mxu0 0.0
      %2080 = vmatprep.subr.mxu0 0.0
      %2081 = vmatpush2.msra.mxu0 0.0
      %2082 = vmatprep.subr.mxu0 0.0
      %2083 = vmatpush2.msra.mxu0 0.0
      %2084 = vmatprep.subr.mxu0 0.0
      %2085 = vmatpush2.msra.mxu0 0.0
      %2086 = vmatprep.subr.mxu0 0.0
      %2087 = vmatpush2.msra.mxu0 0.0
      %2088 = vmatprep.subr.mxu0 0.0
      %2089 = vmatpush2.msra.mxu0 0.0
      %2090 = vmatprep.subr.mxu0 0.0
      %2091 = vmatpush2.msra.mxu0 0.0
      %2092 = vmatprep.subr.mxu0 0.0
      %2093 = vmatpush2.msra.mxu0 0.0
      %2094 = vmatprep.subr.mxu0 0.0
      %2095 = vmatpush2.msra.mxu0 0.0
      %2096 = vmatprep.subr.mxu0 0.0
      %2097 = vmatpush2.msra.mxu0 0.0
      %2098 = vmatprep.subr.mxu0 0.0
      %2099 = vmatpush2.msra.mxu0 0.0
      %2100 = vmatprep.subr.mxu0 0.0
      %2101 = vmatpush2.msra.mxu0 0.0
      %2102 = vmatprep.subr.mxu0 0.0
      %2103 = vmatpush2.msra.mxu0 0.0
      %2104 = vmatprep.subr.mxu0 0.0
      %2105 = vmatpush2.msra.mxu0 0.0
      %2106 = vmatprep.subr.mxu0 0.0
      %2107 = vmatpush2.msra.mxu0 0.0
      %2108 = vmatprep.mubr.f32.mxu0 0.0
      %2109 = vmatmul.mubr.f32.gmra.mxu0 %v2036
      %v2110 = vpop.f32.mrf.mxu0
      %v2111 = vadd.f32 0.0, %v2110
      %v2112 = vpop.f32.mrf.mxu0
      %2113 = vmatprep.mubr.f32.mxu0 0.0
      %2114 = vmatmul.mubr.f32.gmra.mxu0 %v2039
      %v2115 = vpop.f32.mrf.mxu0
      %v2116 = vadd.f32 0.0, %v2115
      %v2117 = vpop.f32.mrf.mxu0
      %2118 = vdwg.mxu0
      %v2119 = vmax.f32 %v2111, 0.0
      %v2120 = vmax.f32 %v2116, 0.0
      %v2121 = vld [vmem:[%s8] sm:$0x3f]
      %s2122 = scalar_lea.vmem %s8, 8
      %v2123 = vld [vmem:[%s2122] sm:$0x3f]
      %v2127 = vrot.slane %v2119, 1
      %v2128 = vrot.slane %v2120, 1
      %v2129 = vsel %vm653, %v2127, %v2128
      %v2130 = vrot.slane 0.0, 1
      %v2131 = vsel %vm653, %v2128, %v2130
      %v2132 = vsel %vm1402, %v2129, 0
      %v2134 = vsel %vm1402, %v2131, 0
      %v2137 = vsel %vm827, %v2123, 0
      %2139 = vmatprep.subr.mxu0 0.0
      %2140 = vmatpush1.msra.mxu0 0.0
      %2141 = vmatprep.subr.mxu0 0.0
      %2142 = vmatpush1.msra.mxu0 0.0
      %2143 = vmatprep.subr.mxu0 0.0
      %2144 = vmatpush1.msra.mxu0 0.0
      %2145 = vmatprep.subr.mxu0 0.0
      %2146 = vmatpush1.msra.mxu0 0.0
      %2147 = vmatprep.subr.mxu0 0.0
      %2148 = vmatpush1.msra.mxu0 0.0
      %2149 = vmatprep.subr.mxu0 0.0
      %2150 = vmatpush1.msra.mxu0 0.0
      %2151 = vmatprep.subr.mxu0 0.0
      %2152 = vmatpush1.msra.mxu0 0.0
      %2153 = vmatprep.subr.mxu0 0.0
      %2154 = vmatpush1.msra.mxu0 0.0
      %2155 = vmatprep.subr.mxu0 0.0
      %2156 = vmatpush1.msra.mxu0 0.0
      %2157 = vmatprep.subr.mxu0 0.0
      %2158 = vmatpush1.msra.mxu0 0.0
      %2159 = vmatprep.subr.mxu0 0.0
      %2160 = vmatpush1.msra.mxu0 0.0
      %2161 = vmatprep.subr.mxu0 0.0
      %2162 = vmatpush1.msra.mxu0 0.0
      %2163 = vmatprep.subr.mxu0 0.0
      %2164 = vmatpush1.msra.mxu0 0.0
      %2165 = vmatprep.subr.mxu0 0.0
      %2166 = vmatpush1.msra.mxu0 0.0
      %2167 = vmatprep.subr.mxu0 0.0
      %2168 = vmatpush1.msra.mxu0 0.0
      %2169 = vmatprep.subr.mxu0 0.0
      %2170 = vmatpush1.msra.mxu0 %v2137
      %2171 = vmatprep.subr.mxu0 0.0
      %2172 = vmatpush2.msra.mxu0 0.0
      %2173 = vmatprep.subr.mxu0 0.0
      %2174 = vmatpush2.msra.mxu0 0.0
      %2175 = vmatprep.subr.mxu0 0.0
      %2176 = vmatpush2.msra.mxu0 0.0
      %2177 = vmatprep.subr.mxu0 0.0
      %2178 = vmatpush2.msra.mxu0 0.0
      %2179 = vmatprep.subr.mxu0 0.0
      %2180 = vmatpush2.msra.mxu0 0.0
      %2181 = vmatprep.subr.mxu0 0.0
      %2182 = vmatpush2.msra.mxu0 0.0
      %2183 = vmatprep.subr.mxu0 0.0
      %2184 = vmatpush2.msra.mxu0 0.0
      %2185 = vmatprep.subr.mxu0 0.0
      %2186 = vmatpush2.msra.mxu0 0.0
      %2187 = vmatprep.subr.mxu0 0.0
      %2188 = vmatpush2.msra.mxu0 0.0
      %2189 = vmatprep.subr.mxu0 0.0
      %2190 = vmatpush2.msra.mxu0 0.0
      %2191 = vmatprep.subr.mxu0 0.0
      %2192 = vmatpush2.msra.mxu0 0.0
      %2193 = vmatprep.subr.mxu0 0.0
      %2194 = vmatpush2.msra.mxu0 0.0
      %2195 = vmatprep.subr.mxu0 0.0
      %2196 = vmatpush2.msra.mxu0 0.0
      %2197 = vmatprep.subr.mxu0 0.0
      %2198 = vmatpush2.msra.mxu0 0.0
      %2199 = vmatprep.subr.mxu0 0.0
      %2200 = vmatpush2.msra.mxu0 0.0
      %2201 = vmatprep.subr.mxu0 0.0
      %2202 = vmatpush2.msra.mxu0 0.0
      %2203 = vmatprep.mubr.f32.mxu0 0.0
      %2204 = vmatmul.mubr.f32.gmra.mxu0 %v2132
      %v2205 = vpop.f32.mrf.mxu0
      %v2206 = vadd.f32 0.0, %v2205
      %v2207 = vpop.f32.mrf.mxu0
      %2208 = vmatprep.mubr.f32.mxu0 0.0
      %2209 = vmatmul.mubr.f32.gmra.mxu0 %v2134
      %v2210 = vpop.f32.mrf.mxu0
      %v2211 = vadd.f32 0.0, %v2210
      %v2212 = vpop.f32.mrf.mxu0
      %2213 = vdwg.mxu0
      %v2214 = vsel %vm1402, %v2119, 0
      %v2216 = vsel %vm1402, %v2120, 0
      %v2219 = vsel %vm827, %v2121, 0
      %2221 = vmatprep.subr.mxu0 0.0
      %2222 = vmatpush1.msra.mxu0 0.0
      %2223 = vmatprep.subr.mxu0 0.0
      %2224 = vmatpush1.msra.mxu0 0.0
      %2225 = vmatprep.subr.mxu0 0.0
      %2226 = vmatpush1.msra.mxu0 0.0
      %2227 = vmatprep.subr.mxu0 0.0
      %2228 = vmatpush1.msra.mxu0 0.0
      %2229 = vmatprep.subr.mxu0 0.0
      %2230 = vmatpush1.msra.mxu0 0.0
      %2231 = vmatprep.subr.mxu0 0.0
      %2232 = vmatpush1.msra.mxu0 0.0
      %2233 = vmatprep.subr.mxu0 0.0
      %2234 = vmatpush1.msra.mxu0 0.0
      %2235 = vmatprep.subr.mxu0 0.0
      %2236 = vmatpush1.msra.mxu0 0.0
      %2237 = vmatprep.subr.mxu0 0.0
      %2238 = vmatpush1.msra.mxu0 0.0
      %2239 = vmatprep.subr.mxu0 0.0
      %2240 = vmatpush1.msra.mxu0 0.0
      %2241 = vmatprep.subr.mxu0 0.0
      %2242 = vmatpush1.msra.mxu0 0.0
      %2243 = vmatprep.subr.mxu0 0.0
      %2244 = vmatpush1.msra.mxu0 0.0
      %2245 = vmatprep.subr.mxu0 0.0
      %2246 = vmatpush1.msra.mxu0 0.0
      %2247 = vmatprep.subr.mxu0 0.0
      %2248 = vmatpush1.msra.mxu0 0.0
      %2249 = vmatprep.subr.mxu0 0.0
      %2250 = vmatpush1.msra.mxu0 0.0
      %2251 = vmatprep.subr.mxu0 0.0
      %2252 = vmatpush1.msra.mxu0 %v2219
      %2253 = vmatprep.subr.mxu0 0.0
      %2254 = vmatpush2.msra.mxu0 0.0
      %2255 = vmatprep.subr.mxu0 0.0
      %2256 = vmatpush2.msra.mxu0 0.0
      %2257 = vmatprep.subr.mxu0 0.0
      %2258 = vmatpush2.msra.mxu0 0.0
      %2259 = vmatprep.subr.mxu0 0.0
      %2260 = vmatpush2.msra.mxu0 0.0
      %2261 = vmatprep.subr.mxu0 0.0
      %2262 = vmatpush2.msra.mxu0 0.0
      %2263 = vmatprep.subr.mxu0 0.0
      %2264 = vmatpush2.msra.mxu0 0.0
      %2265 = vmatprep.subr.mxu0 0.0
      %2266 = vmatpush2.msra.mxu0 0.0
      %2267 = vmatprep.subr.mxu0 0.0
      %2268 = vmatpush2.msra.mxu0 0.0
      %2269 = vmatprep.subr.mxu0 0.0
      %2270 = vmatpush2.msra.mxu0 0.0
      %2271 = vmatprep.subr.mxu0 0.0
      %2272 = vmatpush2.msra.mxu0 0.0
      %2273 = vmatprep.subr.mxu0 0.0
      %2274 = vmatpush2.msra.mxu0 0.0
      %2275 = vmatprep.subr.mxu0 0.0
      %2276 = vmatpush2.msra.mxu0 0.0
      %2277 = vmatprep.subr.mxu0 0.0
      %2278 = vmatpush2.msra.mxu0 0.0
      %2279 = vmatprep.subr.mxu0 0.0
      %2280 = vmatpush2.msra.mxu0 0.0
      %2281 = vmatprep.subr.mxu0 0.0
      %2282 = vmatpush2.msra.mxu0 0.0
      %2283 = vmatprep.subr.mxu0 0.0
      %2284 = vmatpush2.msra.mxu0 0.0
      %2285 = vmatprep.mubr.f32.mxu0 0.0
      %2286 = vmatmul.mubr.f32.gmra.mxu0 %v2214
      %v2287 = vpop.f32.mrf.mxu0
      %v2288 = vadd.f32 %v2206, %v2287
      %v2289 = vpop.f32.mrf.mxu0
      %2290 = vmatprep.mubr.f32.mxu0 0.0
      %2291 = vmatmul.mubr.f32.gmra.mxu0 %v2216
      %v2292 = vpop.f32.mrf.mxu0
      %v2293 = vadd.f32 %v2211, %v2292
      %v2294 = vpop.f32.mrf.mxu0
      %2295 = vdwg.mxu0
      %v2296 = vld [vmem:[%s9] sm:$0x1]
      %v2298 = vlaneseq
      %v2299 = vshrl.u32 %v2298, 7
      %v2300 = vsub.s32 0, %v2299
      %v2301 = vrot.slane %v2296, %v2300
      %v2303 = vadd.f32 %v2288, %v2301
      %v2304 = vadd.f32 %v2293, %v2301
      %v2305 = vmax.f32 %v2303, 0.0
      %v2306 = vmax.f32 %v2304, 0.0
      %v2307 = vld [vmem:[%s10] sm:$0xff]
      %v2308 = vld [vmem:[%s11] sm:$0x1]
      %v2310 = vlaneseq
      %v2311 = vshrl.u32 %v2310, 7
      %v2312 = vsub.s32 0, %v2311
      %v2313 = vrot.slane %v2308, %v2312
      %v2316 = vsel %vm478, %v2305, 0
      %v2319 = vsel %vm478, %v2306, 0
      %2321 = vmatprep.subr.mxu0 0.0
      %2322 = vmatpush1.msra.mxu0 0.0
      %2323 = vmatprep.subr.mxu0 0.0
      %2324 = vmatpush1.msra.mxu0 0.0
      %2325 = vmatprep.subr.mxu0 0.0
      %2326 = vmatpush1.msra.mxu0 0.0
      %2327 = vmatprep.subr.mxu0 0.0
      %2328 = vmatpush1.msra.mxu0 0.0
      %2329 = vmatprep.subr.mxu0 0.0
      %2330 = vmatpush1.msra.mxu0 0.0
      %2331 = vmatprep.subr.mxu0 0.0
      %2332 = vmatpush1.msra.mxu0 0.0
      %2333 = vmatprep.subr.mxu0 0.0
      %2334 = vmatpush1.msra.mxu0 0.0
      %2335 = vmatprep.subr.mxu0 0.0
      %2336 = vmatpush1.msra.mxu0 0.0
      %2337 = vmatprep.subr.mxu0 0.0
      %2338 = vmatpush1.msra.mxu0 0.0
      %2339 = vmatprep.subr.mxu0 0.0
      %2340 = vmatpush1.msra.mxu0 0.0
      %2341 = vmatprep.subr.mxu0 0.0
      %2342 = vmatpush1.msra.mxu0 0.0
      %2343 = vmatprep.subr.mxu0 0.0
      %2344 = vmatpush1.msra.mxu0 0.0
      %2345 = vmatprep.subr.mxu0 0.0
      %2346 = vmatpush1.msra.mxu0 0.0
      %2347 = vmatprep.subr.mxu0 0.0
      %2348 = vmatpush1.msra.mxu0 0.0
      %2349 = vmatprep.subr.mxu0 0.0
      %2350 = vmatpush1.msra.mxu0 0.0
      %2351 = vmatprep.subr.mxu0 0.0
      %2352 = vmatpush1.msra.mxu0 %v2307
      %2353 = vmatprep.subr.mxu0 0.0
      %2354 = vmatpush2.msra.mxu0 0.0
      %2355 = vmatprep.subr.mxu0 0.0
      %2356 = vmatpush2.msra.mxu0 0.0
      %2357 = vmatprep.subr.mxu0 0.0
      %2358 = vmatpush2.msra.mxu0 0.0
      %2359 = vmatprep.subr.mxu0 0.0
      %2360 = vmatpush2.msra.mxu0 0.0
      %2361 = vmatprep.subr.mxu0 0.0
      %2362 = vmatpush2.msra.mxu0 0.0
      %2363 = vmatprep.subr.mxu0 0.0
      %2364 = vmatpush2.msra.mxu0 0.0
      %2365 = vmatprep.subr.mxu0 0.0
      %2366 = vmatpush2.msra.mxu0 0.0
      %2367 = vmatprep.subr.mxu0 0.0
      %2368 = vmatpush2.msra.mxu0 0.0
      %2369 = vmatprep.subr.mxu0 0.0
      %2370 = vmatpush2.msra.mxu0 0.0
      %2371 = vmatprep.subr.mxu0 0.0
      %2372 = vmatpush2.msra.mxu0 0.0
      %2373 = vmatprep.subr.mxu0 0.0
      %2374 = vmatpush2.msra.mxu0 0.0
      %2375 = vmatprep.subr.mxu0 0.0
      %2376 = vmatpush2.msra.mxu0 0.0
      %2377 = vmatprep.subr.mxu0 0.0
      %2378 = vmatpush2.msra.mxu0 0.0
      %2379 = vmatprep.subr.mxu0 0.0
      %2380 = vmatpush2.msra.mxu0 0.0
      %2381 = vmatprep.subr.mxu0 0.0
      %2382 = vmatpush2.msra.mxu0 0.0
      %2383 = vmatprep.subr.mxu0 0.0
      %2384 = vmatpush2.msra.mxu0 0.0
      %2385 = vmatprep.mubr.f32.mxu0 0.0
      %2386 = vmatmul.mubr.f32.gmra.mxu0 %v2316
      %v2387 = vpop.f32.mrf.mxu0
      %v2388 = vadd.f32 %v2313, %v2387
      %v2389 = vpop.f32.mrf.mxu0
      %2390 = vmatprep.mubr.f32.mxu0 0.0
      %2391 = vmatmul.mubr.f32.gmra.mxu0 %v2319
      %v2392 = vpop.f32.mrf.mxu0
      %v2393 = vadd.f32 %v2313, %v2392
      %v2394 = vpop.f32.mrf.mxu0
      %2395 = vdwg.mxu0
      %v2396 = vadd.f32 %v2388, %v552
      %v2397 = vadd.f32 %v2393, %v557
      %v2398 = vmax.f32 %v2396, 0.0
      %v2399 = vmax.f32 %v2397, 0.0
      %2400 = vst.msk [vmem:[%s467] sm:$0xff] %vm478, %v2398
      %2401 = vst.msk [vmem:[%s467 + $0x8] sm:$0xff] %vm478, %v2399
      %p2402 = scmp.lt.s32.totalorder %s25, 1
      %s2403 = scalar_select %p2402, %s25, 1
      %s2404 = smul.addr %s2403, 2
      %s2405 = smul.addr %s2404, 8
      %s2406 = scalar_lea.vmem %s14, %s2405
      // Predicated region
      $region77: #{tpu_custom_call.1} parent=75 // pred_check
        %p2407 = pneg %p342
      $region78: #{tpu_custom_call.1} parent=75 // pred_check_branch
        %2409 = sbr.rel (%p2407) target = $region80
      $region79: #{tpu_custom_call.1} parent=75 // pred_region
        _
      $region80: #{tpu_custom_call.1} parent=75 // pred_fallthru
        _
    $region76: #{tpu_custom_call.1} parent=5 // pred_fallthru
      _
    %p2410 = scmp.le.s32.totalorder 2, %s20
    // Predicated region
    $region81: #{tpu_custom_call.1} parent=5 // pred_check
      %p2411 = pneg %p2410
    $region82: #{tpu_custom_call.1} parent=5 // pred_check_branch
      %2413 = sbr.rel (%p2411) target = $region84
    $region83: #{tpu_custom_call.1} parent=5 // pred_region
      %s2414 = ssub.s32 %s20, 2
      // Predicated region
      $region85: #{tpu_custom_call.1} parent=83 // pred_check
        %p2415 = pneg %p348
      $region86: #{tpu_custom_call.1} parent=83 // pred_check_branch
        %2417 = sbr.rel (%p2415) target = $region88
      $region87: #{tpu_custom_call.1} parent=83 // pred_region
        %p2418 = scmp.lt.s32.totalorder %s26, 1
        %s2419 = scalar_select %p2418, %s26, 1
        %s2420 = smul.addr %s2419, 2
        %s2421 = smul.addr %s2420, 8
        %s2422 = scalar_lea.vmem %s14, %s2421
      $region88: #{tpu_custom_call.1} parent=83 // pred_fallthru
        _
    $region84: #{tpu_custom_call.1} parent=5 // pred_fallthru
      _
  $region6: #{tpu_custom_call.1} parent=0 // loop_footer
    %s24 = sadd.s32 1, %s20
  $region7: #{tpu_custom_call.1} parent=0 // loop_footer_branch
    %19 = sbr.rel target = $region3
  $region8: #{tpu_custom_call.1} parent=0 // loop_exit
    _

</llo_original>
